<compile_context>
chip_gen: v7x
topology: tpu7x:2x2x1
jax: 0.10.0
libtpu: 0.0.40
codegen_flags: <defaults>
</compile_context>

<pallas_src>
import jax
import jax.numpy as jnp
from jax.experimental import pallas as pl
from jax.experimental.pallas import tpu as pltpu


# ----------------------------- config --------------------------------------
K_LAYERS = 3          # number of affine coupling layers in the synthetic flow
HIDDEN = 128          # hidden width of the per-layer scale/shift MLP


def _has_bf16_vector_units():
    """bf16 VPU/EUP exists on v6e/v7x; fall back to f32 elsewhere (e.g. v5e)."""
    try:
        kind = jax.devices()[0].device_kind.lower()
    except Exception:
        return False
    return any(tag in kind for tag in ("v6", "v7", "7x"))


# ----------------------------- kernel --------------------------------------
def _make_flow_reverse_kernel(act_dtype):
    """Build the kernel with the transcendental dtype baked in (bf16 on v6e/v7x)."""

    def flow_reverse_kernel(y_ref, w1_ref, b1_ref, w2_ref, b2_ref, perm_ref,
                            out_ref):
        """Invert K_LAYERS affine coupling layers on a (TN, D) row tile.

        Forward layer k:
            x1, x2 = x[:, :D2], x[:, D2:]
            h      = tanh(x1 @ W1[k] + b1[k])
            st     = h @ W2[k] + b2[k];  s = tanh(st[:, :D2]);  t = st[:, D2:]
            y      = concat(x2 * exp(s) + t, x1)
        The kernel applies the inverse stack (layers in reverse order), then
        folds the (C,H,W)->(H,W,C) lane permutation into the final store.
        """
        D = y_ref.shape[-1]
        D2 = D // 2

        # Carry the two halves separately -> no per-layer concat/slice copies.
        a = y_ref[:, :D2].astype(jnp.float32)   # "y1" half
        b = y_ref[:, D2:].astype(jnp.float32)   # "y2" half (== x1 of last fwd layer)

        for k in range(K_LAYERS - 1, -1, -1):
            x1 = b
            # bf16 MXU operands (AMP-like), f32 accumulation.
            x1_bf = x1.astype(jnp.bfloat16)
            pre = (jnp.dot(x1_bf, w1_ref[k],
                           preferred_element_type=jnp.float32) + b1_ref[k])
            h = jnp.tanh(pre.astype(act_dtype))      # bf16 EUP on v6e/v7x, f32 on v5e
            h_bf = h.astype(jnp.bfloat16)
            # Fused s/t GEMM: one (HIDDEN, D) matmul fills the 256-wide MXU on
            # v6e/v7x (vs two half-width N=128 matmuls).  The column split at
            # D2 is a 128-lane tile boundary, so the slices are free.
            st = (jnp.dot(h_bf, w2_ref[k],
                          preferred_element_type=jnp.float32) + b2_ref[k])
            s = jnp.tanh(st[:, :D2].astype(act_dtype))
            t = st[:, D2:]
            x2 = (a - t) * jnp.exp(-s).astype(jnp.float32)
            a, b = x1, x2

        # Channels-last permutation folded into the store: out = [a | b] @ P,
        # computed as a @ P[:D2] + b @ P[D2:].  P is a bf16 0/1 matrix and the
        # operands are bf16 -> single-pass MXU (the old f32 path cost as many
        # MXU cycles as the whole coupling stack).  Each output column picks
        # exactly one bf16 input value, accumulated in f32, so the permute
        # itself is exact.
        # TODO(synk): replace with an XLU lane shuffle / strided channel store
        # (drops the (D, D) operand entirely; matters for large D on v7x).
        out_ref[...] = (
            jnp.dot(a.astype(jnp.bfloat16), perm_ref[:D2, :],
                    preferred_element_type=jnp.float32)
            + jnp.dot(b.astype(jnp.bfloat16), perm_ref[D2:, :],
                      preferred_element_type=jnp.float32)
        ).astype(out_ref.dtype)

    return flow_reverse_kernel


# ----------------------------- tiling / limits ------------------------------
def _round_up(x, m):
    return ((x + m - 1) // m) * m


def _pick_row_tile(n):
    # Big tiles amortize the ~0.35us/step pipeline overhead, but keep at least
    # 2 grid steps whenever possible so (a) v7x's two TensorCores both get work
    # via dimension_semantics=("parallel",) and (b) prefetch/writeback overlap
    # compute.  Cap at 512 rows so double-buffered f32 in/out tiles + f32 temps
    # stay comfortably inside v7x's 64 MiB VMEM.
    # TODO(synk): allow 1024-2048 row tiles on v5e/v6e (128 MiB VMEM) for very
    # large N (modest ~5-10% win from fewer grid steps).
    tn = min(512, _round_up(max(pl.cdiv(n, 2), 8), 8))
    return min(tn, _round_up(n, 8))


def _vmem_limit_bytes(tn, d, hidden, n_layers):
    """Right-sized scoped-VMEM request instead of a blanket 48 MiB."""
    io_blocks = 2 * 2 * tn * d * 4                              # 2x dbl-buffered f32 tiles
    weights = n_layers * ((d // 2) * hidden + hidden * d) * 2   # bf16 W1 + fused W2
    biases = n_layers * (hidden + d) * 4                        # f32 b1 + b2
    perm = d * d * 2                                            # bf16 permutation
    consts = 2 * (weights + biases + perm)                      # constants double-buffered
    temps = 8 * tn * d * 4                                      # f32 temporaries headroom
    total = io_blocks + consts + temps + (4 << 20)              # + compiler scratch
    return int(max(16 << 20, min(total, 40 << 20)))


# ----------------------------- pallas wrapper -------------------------------
def run_flow_reverse(y, kparams, perm, act_dtype):
    """y: (N, D) f32 latents -> (N, D) reconstructed rows, HWC-flat lane order."""
    N, D = y.shape
    w1, b1, w2, b2 = kparams
    TN = _pick_row_tile(N)
    grid = (pl.cdiv(N, TN),)

    def const_spec(shape):
        # Constant index_map -> fetched once, held resident across the grid.
        # TODO(synk): pipeline_mode=pl.Buffered(1) would drop the constants'
        # second buffer (only matters for large D on v7x's 64 MiB VMEM).
        return pl.BlockSpec(shape, lambda i, _s=len(shape): (0,) * _s)

    return pl.pallas_call(
        _make_flow_reverse_kernel(act_dtype),
        out_shape=jax.ShapeDtypeStruct((N, D), jnp.float32),
        grid_spec=pltpu.PrefetchScalarGridSpec(
            num_scalar_prefetch=0,
            grid=grid,
            in_specs=[
                pl.BlockSpec((TN, D), lambda i: (i, 0)),   # activations (row tiled)
                const_spec(w1.shape), const_spec(b1.shape),
                const_spec(w2.shape), const_spec(b2.shape),
                const_spec(perm.shape),
            ],
            out_specs=pl.BlockSpec((TN, D), lambda i: (i, 0)),
        ),
        compiler_params=pltpu.CompilerParams(
            dimension_semantics=("parallel",),
            vmem_limit_bytes=_vmem_limit_bytes(TN, D, HIDDEN, K_LAYERS),
        ),
    )(y, w1, b1, w2, b2, perm)


# --------------------- pure-JAX reference (mirrors kernel math) -------------
def flow_reverse_ref(y, kparams, act_dtype):
    w1, b1, w2, b2 = kparams
    D = y.shape[-1]
    D2 = D // 2
    a = y[:, :D2].astype(jnp.float32)
    b = y[:, D2:].astype(jnp.float32)
    for k in range(K_LAYERS - 1, -1, -1):
        x1 = b
        pre = jnp.dot(x1.astype(jnp.bfloat16), w1[k],
                      preferred_element_type=jnp.float32) + b1[k]
        h = jnp.tanh(pre.astype(act_dtype))
        h_bf = h.astype(jnp.bfloat16)
        st = jnp.dot(h_bf, w2[k], preferred_element_type=jnp.float32) + b2[k]
        s = jnp.tanh(st[:, :D2].astype(act_dtype))
        t = st[:, D2:]
        x2 = (a - t) * jnp.exp(-s).astype(jnp.float32)
        a, b = x1, x2
    # Mirror the kernel's bf16 cast on the permute inputs (CHW-flat order).
    return jnp.concatenate([a, b], axis=-1).astype(jnp.bfloat16).astype(jnp.float32)


# ----------------------------- module glue ---------------------------------
class ContDist:
    """Stand-in for tools.ContDist(Independent(Normal(mean, 0.01), 3))."""

    def __init__(self, mean, std):
        self.mean = mean
        self.std = std

    def mode(self):
        return self.mean


def make_chw_to_hwc_perm(C, H, W):
    """bf16 P such that (rec_chw_flat @ P) is the (H, W, C)-flattened row."""
    D = C * H * W
    src = jnp.arange(D).reshape(C, H, W).transpose(1, 2, 0).reshape(D)
    p = jnp.zeros((D, D), jnp.float32).at[src, jnp.arange(D)].set(1.0)
    return p.astype(jnp.bfloat16)   # exact for 0/1, halves VMEM, single-pass MXU


def prepare_kernel_params(w1, b1, w2, b2):
    """Cast matmul weights to bf16 host-side; keep W2 fused (HIDDEN, D)."""
    return (w1.astype(jnp.bfloat16), b1, w2.astype(jnp.bfloat16), b2)


class FlowDecoder:
    def __init__(self, feat_dim, img_shape_CHW, flow_params):
        C, H, W = img_shape_CHW
        assert feat_dim == C * H * W, "flow is dimension-preserving"
        self.CHW = img_shape_CHW
        self.kparams = prepare_kernel_params(*flow_params)
        self.perm = make_chw_to_hwc_perm(C, H, W)
        self.act_dtype = (jnp.bfloat16 if _has_bf16_vector_units()
                          else jnp.float32)
        # TODO(synk): torch.amp autocast emulated via bf16 MXU operands with
        # f32 accumulation; I/O stays f32 like the torch module (bf16 I/O at
        # the pallas_call boundary would halve v5e's exposed DMA if callers
        # tolerate it).

    def __call__(self, feat):
        B, L, D = feat.shape
        x = feat.reshape(B * L, D).astype(jnp.float32)
        rec_hwc = run_flow_reverse(x, self.kparams, self.perm, self.act_dtype)
        C, H, W = self.CHW
        x_rec = rec_hwc.reshape(B, L, H, W, C)   # free view; permute done in-kernel
        return {"image": ContDist(x_rec, 0.01)}


def init_flow_params(key, feat_dim, hidden=HIDDEN, n_layers=K_LAYERS, scale=0.05):
    D2 = feat_dim // 2
    k1, k2, k3, k4 = jax.random.split(key, 4)
    w1 = scale * jax.random.normal(k1, (n_layers, D2, hidden), jnp.float32)
    b1 = scale * jax.random.normal(k2, (n_layers, 1, hidden), jnp.float32)
    w2 = scale * jax.random.normal(k3, (n_layers, hidden, feat_dim), jnp.float32)
    b2 = scale * jax.random.normal(k4, (n_layers, 1, feat_dim), jnp.float32)
    return w1, b1, w2, b2


# ----------------------------- main -----------------------------------------
if __name__ == "__main__":
    B, L = 2, 8
    CHW = (4, 8, 8)                  # C, H, W  ->  D = 256 (lane-aligned)
    C, H, W = CHW
    D = C * H * W

    key = jax.random.PRNGKey(0)
    k_feat, k_par = jax.random.split(key)
    feat = jax.random.normal(k_feat, (B, L, D), jnp.float32)
    raw_params = init_flow_params(k_par, D)

    decoder = FlowDecoder(D, CHW, raw_params)
    out = decoder(feat)
    img_mode = out["image"].mode()
    jax.block_until_ready(img_mode)

    # correctness check against a pure-JAX reference mirroring the kernel math
    rec_ref = flow_reverse_ref(feat.reshape(B * L, D), decoder.kparams,
                               decoder.act_dtype)
    img_ref = rec_ref.reshape(B, L, C, H, W).transpose(0, 1, 3, 4, 2)
    assert img_mode.shape == (B, L, H, W, C)
    assert jnp.allclose(img_mode, img_ref, atol=1e-2, rtol=1e-2), \
        float(jnp.max(jnp.abs(img_mode - img_ref)))

    print("KERNEL_OK")
</pallas_src>

<mosaic_0001>
module attributes {stable_mosaic.version = 11 : i64} {
  func.func @flow_reverse_kernel(%arg0: i32, %arg1: memref<8x256xf32, #tpu.memory_space<vmem>>, %arg2: memref<3x128x128xbf16, #tpu.memory_space<vmem>>, %arg3: memref<3x1x128xf32, #tpu.memory_space<vmem>>, %arg4: memref<3x128x256xbf16, #tpu.memory_space<vmem>>, %arg5: memref<3x1x256xf32, #tpu.memory_space<vmem>>, %arg6: memref<256x256xbf16, #tpu.memory_space<vmem>>, %arg7: memref<8x256xf32, #tpu.memory_space<vmem>>) attributes {dimension_semantics = [#tpu.dimension_semantics<parallel>], iteration_bounds = array<i64: 2>, scalar_prefetch = 0 : i64, scratch_operands = 0 : i64, tpu.core_type = #tpu.core_type<tc>, window_params = [{transform_indices = @transform_0, window_bounds = array<i64: 8, 256>}, {pipeline_mode = #tpu.pipeline_mode<synchronous>, transform_indices = @transform_1, window_bounds = array<i64: 3, 128, 128>}, {pipeline_mode = #tpu.pipeline_mode<synchronous>, transform_indices = @transform_2, window_bounds = array<i64: 3, 1, 128>}, {pipeline_mode = #tpu.pipeline_mode<synchronous>, transform_indices = @transform_3, window_bounds = array<i64: 3, 128, 256>}, {pipeline_mode = #tpu.pipeline_mode<synchronous>, transform_indices = @transform_4, window_bounds = array<i64: 3, 1, 256>}, {pipeline_mode = #tpu.pipeline_mode<synchronous>, transform_indices = @transform_5, window_bounds = array<i64: 256, 256>}, {transform_indices = @transform_6, window_bounds = array<i64: 8, 256>}]} {
    %c0 = arith.constant 0 : index
    %c0_0 = arith.constant 0 : index
    %0 = vector.load %arg1[%c0, %c0_0] : memref<8x256xf32, #tpu.memory_space<vmem>>, vector<8x128xf32>
    %c0_1 = arith.constant 0 : index
    %c128 = arith.constant 128 : index
    %1 = vector.load %arg1[%c0_1, %c128] : memref<8x256xf32, #tpu.memory_space<vmem>>, vector<8x128xf32>
    %2 = arith.truncf %1 : vector<8x128xf32> to vector<8x128xbf16>
    %c2 = arith.constant 2 : index
    %c0_2 = arith.constant 0 : index
    %c0_3 = arith.constant 0 : index
    %3 = vector.load %arg2[%c2, %c0_2, %c0_3] : memref<3x128x128xbf16, #tpu.memory_space<vmem>>, vector<1x128x128xbf16>
    %4 = vector.shape_cast %3 : vector<1x128x128xbf16> to vector<128x128xbf16>
    %cst = arith.constant dense<0.000000e+00> : vector<8x128xf32>
    %5 = tpu.matmul %2, %4, %cst {dimension_numbers = #tpu.dot_dimension_numbers<[1], [0], [0], [1], [0, 0, 1, 1], [], []>} : vector<8x128xbf16>, vector<128x128xbf16>, vector<8x128xf32> -> vector<8x128xf32>
    %c2_4 = arith.constant 2 : index
    %c0_5 = arith.constant 0 : index
    %c0_6 = arith.constant 0 : index
    %6 = vector.load %arg3[%c2_4, %c0_5, %c0_6] : memref<3x1x128xf32, #tpu.memory_space<vmem>>, vector<1x1x128xf32>
    %7 = vector.shape_cast %6 : vector<1x1x128xf32> to vector<1x128xf32>
    %8 = vector.broadcast %7 : vector<1x128xf32> to vector<8x128xf32>
    %9 = arith.addf %5, %8 : vector<8x128xf32>
    %10 = math.tanh %9 : vector<8x128xf32>
    %11 = arith.truncf %10 : vector<8x128xf32> to vector<8x128xbf16>
    %c2_7 = arith.constant 2 : index
    %c0_8 = arith.constant 0 : index
    %c0_9 = arith.constant 0 : index
    %12 = vector.load %arg4[%c2_7, %c0_8, %c0_9] : memref<3x128x256xbf16, #tpu.memory_space<vmem>>, vector<1x128x256xbf16>
    %13 = vector.shape_cast %12 : vector<1x128x256xbf16> to vector<128x256xbf16>
    %cst_10 = arith.constant dense<0.000000e+00> : vector<8x256xf32>
    %14 = tpu.matmul %11, %13, %cst_10 {dimension_numbers = #tpu.dot_dimension_numbers<[1], [0], [0], [1], [0, 0, 1, 1], [], []>} : vector<8x128xbf16>, vector<128x256xbf16>, vector<8x256xf32> -> vector<8x256xf32>
    %c2_11 = arith.constant 2 : index
    %c0_12 = arith.constant 0 : index
    %c0_13 = arith.constant 0 : index
    %15 = vector.load %arg5[%c2_11, %c0_12, %c0_13] : memref<3x1x256xf32, #tpu.memory_space<vmem>>, vector<1x1x256xf32>
    %16 = vector.shape_cast %15 : vector<1x1x256xf32> to vector<1x256xf32>
    %17 = vector.broadcast %16 : vector<1x256xf32> to vector<8x256xf32>
    %18 = arith.addf %14, %17 : vector<8x256xf32>
    %19 = vector.extract_strided_slice %18 {offsets = [0, 0], sizes = [8, 128], strides = [1, 1]} : vector<8x256xf32> to vector<8x128xf32>
    %20 = math.tanh %19 : vector<8x128xf32>
    %21 = vector.extract_strided_slice %18 {offsets = [0, 128], sizes = [8, 128], strides = [1, 1]} : vector<8x256xf32> to vector<8x128xf32>
    %22 = arith.subf %0, %21 : vector<8x128xf32>
    %cst_14 = arith.constant 0.000000e+00 : f32
    %23 = vector.broadcast %cst_14 : f32 to vector<8x128xf32>
    %24 = arith.subf %23, %20 : vector<8x128xf32>
    %25 = math.exp %24 : vector<8x128xf32>
    %26 = arith.mulf %22, %25 : vector<8x128xf32>
    %27 = arith.truncf %26 : vector<8x128xf32> to vector<8x128xbf16>
    %c1 = arith.constant 1 : index
    %c0_15 = arith.constant 0 : index
    %c0_16 = arith.constant 0 : index
    %28 = vector.load %arg2[%c1, %c0_15, %c0_16] : memref<3x128x128xbf16, #tpu.memory_space<vmem>>, vector<1x128x128xbf16>
    %29 = vector.shape_cast %28 : vector<1x128x128xbf16> to vector<128x128xbf16>
    %cst_17 = arith.constant dense<0.000000e+00> : vector<8x128xf32>
    %30 = tpu.matmul %27, %29, %cst_17 {dimension_numbers = #tpu.dot_dimension_numbers<[1], [0], [0], [1], [0, 0, 1, 1], [], []>} : vector<8x128xbf16>, vector<128x128xbf16>, vector<8x128xf32> -> vector<8x128xf32>
    %c1_18 = arith.constant 1 : index
    %c0_19 = arith.constant 0 : index
    %c0_20 = arith.constant 0 : index
    %31 = vector.load %arg3[%c1_18, %c0_19, %c0_20] : memref<3x1x128xf32, #tpu.memory_space<vmem>>, vector<1x1x128xf32>
    %32 = vector.shape_cast %31 : vector<1x1x128xf32> to vector<1x128xf32>
    %33 = vector.broadcast %32 : vector<1x128xf32> to vector<8x128xf32>
    %34 = arith.addf %30, %33 : vector<8x128xf32>
    %35 = math.tanh %34 : vector<8x128xf32>
    %36 = arith.truncf %35 : vector<8x128xf32> to vector<8x128xbf16>
    %c1_21 = arith.constant 1 : index
    %c0_22 = arith.constant 0 : index
    %c0_23 = arith.constant 0 : index
    %37 = vector.load %arg4[%c1_21, %c0_22, %c0_23] : memref<3x128x256xbf16, #tpu.memory_space<vmem>>, vector<1x128x256xbf16>
    %38 = vector.shape_cast %37 : vector<1x128x256xbf16> to vector<128x256xbf16>
    %cst_24 = arith.constant dense<0.000000e+00> : vector<8x256xf32>
    %39 = tpu.matmul %36, %38, %cst_24 {dimension_numbers = #tpu.dot_dimension_numbers<[1], [0], [0], [1], [0, 0, 1, 1], [], []>} : vector<8x128xbf16>, vector<128x256xbf16>, vector<8x256xf32> -> vector<8x256xf32>
    %c1_25 = arith.constant 1 : index
    %c0_26 = arith.constant 0 : index
    %c0_27 = arith.constant 0 : index
    %40 = vector.load %arg5[%c1_25, %c0_26, %c0_27] : memref<3x1x256xf32, #tpu.memory_space<vmem>>, vector<1x1x256xf32>
    %41 = vector.shape_cast %40 : vector<1x1x256xf32> to vector<1x256xf32>
    %42 = vector.broadcast %41 : vector<1x256xf32> to vector<8x256xf32>
    %43 = arith.addf %39, %42 : vector<8x256xf32>
    %44 = vector.extract_strided_slice %43 {offsets = [0, 0], sizes = [8, 128], strides = [1, 1]} : vector<8x256xf32> to vector<8x128xf32>
    %45 = math.tanh %44 : vector<8x128xf32>
    %46 = vector.extract_strided_slice %43 {offsets = [0, 128], sizes = [8, 128], strides = [1, 1]} : vector<8x256xf32> to vector<8x128xf32>
    %47 = arith.subf %1, %46 : vector<8x128xf32>
    %cst_28 = arith.constant 0.000000e+00 : f32
    %48 = vector.broadcast %cst_28 : f32 to vector<8x128xf32>
    %49 = arith.subf %48, %45 : vector<8x128xf32>
    %50 = math.exp %49 : vector<8x128xf32>
    %51 = arith.mulf %47, %50 : vector<8x128xf32>
    %52 = arith.truncf %51 : vector<8x128xf32> to vector<8x128xbf16>
    %c0_29 = arith.constant 0 : index
    %c0_30 = arith.constant 0 : index
    %c0_31 = arith.constant 0 : index
    %53 = vector.load %arg2[%c0_29, %c0_30, %c0_31] : memref<3x128x128xbf16, #tpu.memory_space<vmem>>, vector<1x128x128xbf16>
    %54 = vector.shape_cast %53 : vector<1x128x128xbf16> to vector<128x128xbf16>
    %cst_32 = arith.constant dense<0.000000e+00> : vector<8x128xf32>
    %55 = tpu.matmul %52, %54, %cst_32 {dimension_numbers = #tpu.dot_dimension_numbers<[1], [0], [0], [1], [0, 0, 1, 1], [], []>} : vector<8x128xbf16>, vector<128x128xbf16>, vector<8x128xf32> -> vector<8x128xf32>
    %c0_33 = arith.constant 0 : index
    %c0_34 = arith.constant 0 : index
    %c0_35 = arith.constant 0 : index
    %56 = vector.load %arg3[%c0_33, %c0_34, %c0_35] : memref<3x1x128xf32, #tpu.memory_space<vmem>>, vector<1x1x128xf32>
    %57 = vector.shape_cast %56 : vector<1x1x128xf32> to vector<1x128xf32>
    %58 = vector.broadcast %57 : vector<1x128xf32> to vector<8x128xf32>
    %59 = arith.addf %55, %58 : vector<8x128xf32>
    %60 = math.tanh %59 : vector<8x128xf32>
    %61 = arith.truncf %60 : vector<8x128xf32> to vector<8x128xbf16>
    %c0_36 = arith.constant 0 : index
    %c0_37 = arith.constant 0 : index
    %c0_38 = arith.constant 0 : index
    %62 = vector.load %arg4[%c0_36, %c0_37, %c0_38] : memref<3x128x256xbf16, #tpu.memory_space<vmem>>, vector<1x128x256xbf16>
    %63 = vector.shape_cast %62 : vector<1x128x256xbf16> to vector<128x256xbf16>
    %cst_39 = arith.constant dense<0.000000e+00> : vector<8x256xf32>
    %64 = tpu.matmul %61, %63, %cst_39 {dimension_numbers = #tpu.dot_dimension_numbers<[1], [0], [0], [1], [0, 0, 1, 1], [], []>} : vector<8x128xbf16>, vector<128x256xbf16>, vector<8x256xf32> -> vector<8x256xf32>
    %c0_40 = arith.constant 0 : index
    %c0_41 = arith.constant 0 : index
    %c0_42 = arith.constant 0 : index
    %65 = vector.load %arg5[%c0_40, %c0_41, %c0_42] : memref<3x1x256xf32, #tpu.memory_space<vmem>>, vector<1x1x256xf32>
    %66 = vector.shape_cast %65 : vector<1x1x256xf32> to vector<1x256xf32>
    %67 = vector.broadcast %66 : vector<1x256xf32> to vector<8x256xf32>
    %68 = arith.addf %64, %67 : vector<8x256xf32>
    %69 = vector.extract_strided_slice %68 {offsets = [0, 0], sizes = [8, 128], strides = [1, 1]} : vector<8x256xf32> to vector<8x128xf32>
    %70 = math.tanh %69 : vector<8x128xf32>
    %71 = vector.extract_strided_slice %68 {offsets = [0, 128], sizes = [8, 128], strides = [1, 1]} : vector<8x256xf32> to vector<8x128xf32>
    %72 = arith.subf %26, %71 : vector<8x128xf32>
    %cst_43 = arith.constant 0.000000e+00 : f32
    %73 = vector.broadcast %cst_43 : f32 to vector<8x128xf32>
    %74 = arith.subf %73, %70 : vector<8x128xf32>
    %75 = math.exp %74 : vector<8x128xf32>
    %76 = arith.mulf %72, %75 : vector<8x128xf32>
    %77 = arith.truncf %51 : vector<8x128xf32> to vector<8x128xbf16>
    %c0_44 = arith.constant 0 : index
    %c0_45 = arith.constant 0 : index
    %78 = vector.load %arg6[%c0_44, %c0_45] : memref<256x256xbf16, #tpu.memory_space<vmem>>, vector<128x256xbf16>
    %cst_46 = arith.constant dense<0.000000e+00> : vector<8x256xf32>
    %79 = tpu.matmul %77, %78, %cst_46 {dimension_numbers = #tpu.dot_dimension_numbers<[1], [0], [0], [1], [0, 0, 1, 1], [], []>} : vector<8x128xbf16>, vector<128x256xbf16>, vector<8x256xf32> -> vector<8x256xf32>
    %80 = arith.truncf %76 : vector<8x128xf32> to vector<8x128xbf16>
    %c128_47 = arith.constant 128 : index
    %c0_48 = arith.constant 0 : index
    %81 = vector.load %arg6[%c128_47, %c0_48] : memref<256x256xbf16, #tpu.memory_space<vmem>>, vector<128x256xbf16>
    %cst_49 = arith.constant dense<0.000000e+00> : vector<8x256xf32>
    %82 = tpu.matmul %80, %81, %cst_49 {dimension_numbers = #tpu.dot_dimension_numbers<[1], [0], [0], [1], [0, 0, 1, 1], [], []>} : vector<8x128xbf16>, vector<128x256xbf16>, vector<8x256xf32> -> vector<8x256xf32>
    %83 = arith.addf %79, %82 : vector<8x256xf32>
    %c0_50 = arith.constant 0 : index
    %c0_51 = arith.constant 0 : index
    %84 = vector.load %arg7[%c0_50, %c0_51] : memref<8x256xf32, #tpu.memory_space<vmem>>, vector<8x256xf32>
    tpu.vector_store %arg7[%c0_50, %c0_51], %83 {strides = array<i32>} : memref<8x256xf32, #tpu.memory_space<vmem>>, vector<8x256xf32>,
    return
  }
  func.func @transform_0(%arg0: i32) -> (i32, i32) {
    %c0_i32 = arith.constant 0 : i32
    %c0_i32_0 = arith.constant 0 : i32
    return %arg0, %c0_i32 : i32, i32
  }
  func.func @transform_1(%arg0: i32) -> (i32, i32, i32) {
    %c0_i32 = arith.constant 0 : i32
    %c0_i32_0 = arith.constant 0 : i32
    %c0_i32_1 = arith.constant 0 : i32
    %c0_i32_2 = arith.constant 0 : i32
    return %c0_i32, %c0_i32_0, %c0_i32_1 : i32, i32, i32
  }
  func.func @transform_2(%arg0: i32) -> (i32, i32, i32) {
    %c0_i32 = arith.constant 0 : i32
    %c0_i32_0 = arith.constant 0 : i32
    %c0_i32_1 = arith.constant 0 : i32
    %c0_i32_2 = arith.constant 0 : i32
    return %c0_i32, %c0_i32_0, %c0_i32_1 : i32, i32, i32
  }
  func.func @transform_3(%arg0: i32) -> (i32, i32, i32) {
    %c0_i32 = arith.constant 0 : i32
    %c0_i32_0 = arith.constant 0 : i32
    %c0_i32_1 = arith.constant 0 : i32
    %c0_i32_2 = arith.constant 0 : i32
    return %c0_i32, %c0_i32_0, %c0_i32_1 : i32, i32, i32
  }
  func.func @transform_4(%arg0: i32) -> (i32, i32, i32) {
    %c0_i32 = arith.constant 0 : i32
    %c0_i32_0 = arith.constant 0 : i32
    %c0_i32_1 = arith.constant 0 : i32
    %c0_i32_2 = arith.constant 0 : i32
    return %c0_i32, %c0_i32_0, %c0_i32_1 : i32, i32, i32
  }
  func.func @transform_5(%arg0: i32) -> (i32, i32) {
    %c0_i32 = arith.constant 0 : i32
    %c0_i32_0 = arith.constant 0 : i32
    %c0_i32_1 = arith.constant 0 : i32
    return %c0_i32, %c0_i32_0 : i32, i32
  }
  func.func @transform_6(%arg0: i32) -> (i32, i32) {
    %c0_i32 = arith.constant 0 : i32
    %c0_i32_0 = arith.constant 0 : i32
    return %arg0, %c0_i32 : i32, i32
  }
}

</mosaic_0001>

<llo_original>
// kernel: tpu_custom_call.1
$region0: #{tpu_custom_call.1}
  #allocation0 [shape = 'u32[]', space=smem, size = 0x4, offset = 0x4, fixed_abs, tag = 'smem constant byte address 0x4 - core index']
  #allocation1 [shape = 'u32[144,128]{1,0:T(1,128)}', space=vmem, size = 0x12000, scoped, tag = 'internal scratch']
  %s0 = inlined_call_operand.hbm [shape: f32[16,256], index: 0, kind: input, shape index: {}]
  %s1 = inlined_call_operand.hbm [shape: bf16[3,128,128], index: 1, kind: input, shape index: {}]
  %s2 = inlined_call_operand.vmem [shape: f32[3,1,128], index: 2, kind: input, shape index: {}]
  %s3 = inlined_call_operand.hbm [shape: bf16[3,128,256], index: 3, kind: input, shape index: {}]
  %s4 = inlined_call_operand.vmem [shape: f32[3,1,256], index: 4, kind: input, shape index: {}]
  %s5 = inlined_call_operand.hbm [shape: bf16[256,256], index: 5, kind: input, shape index: {}]
  %s6 = inlined_call_operand.hbm [shape: f32[16,256], index: 6, kind: output, shape index: {}]
  %s7 = sld [smem:[#allocation0]]
  $region73: #{tpu_custom_call.1} parent=0
    _
  %s9 = ssub.s32 1, %s7
  %s10 = scalar_select 0, %s9, %s7
  $region1: #{tpu_custom_call.1} parent=0
    #allocation2 [shape = 'u8[16384]{0}', space=vmem, size = 0x4000, scoped, tag = 'input window, operand 0']
    #allocation3 [shape = 's32[2]{0}', space=sflag, size = 0x8, scoped, tag = 'scoped memory for tpu_custom_call.1']
    #allocation4 [shape = 's32[2]{0}', space=sflag, size = 0x8, scoped, tag = 'scoped memory for tpu_custom_call.1']
    #allocation5 [shape = 'u8[98304]{0}', space=vmem, size = 0x18000, scoped, tag = 'input window, operand 1, single buffered']
    #allocation6 [shape = 's32[1]{0}', space=sflag, size = 0x4, scoped, tag = 'scoped memory for tpu_custom_call.1']
    #allocation7 [shape = 'u8[196608]{0}', space=vmem, size = 0x30000, scoped, tag = 'input window, operand 3, single buffered']
    #allocation8 [shape = 'u8[131072]{0}', space=vmem, size = 0x20000, scoped, tag = 'input window, operand 5, single buffered']
    #allocation9 [shape = 's32[1]{0}', space=sflag, size = 0x4, scoped, tag = 'scoped memory for tpu_custom_call.1']
    #allocation10 [shape = 'u8[16384]{0}', space=vmem, size = 0x4000, scoped, tag = 'output window, operand 0']
    %11 = vsyncpa [#allocation3], 0
    %s12 = scalar_lea.sflag [#allocation3], 1
    %13 = vsyncpa %s12, 0
    %14 = vsyncpa [#allocation6], 0
    %15 = vsyncpa [#allocation9], 0
    %16 = vsyncpa [#allocation4], 0
    %s17 = scalar_lea.sflag [#allocation4], 1
    %18 = vsyncpa %s17, 0
    loop: start=0, step=1, limit=4
    $region2: #{tpu_custom_call.1} parent=1 // loop_pre_header
      _
    $region3: #{tpu_custom_call.1} parent=1 // loop_header
      %s20 = sphi 0, %s24
      %p21 = scmp.ge.s32.totalorder %s20, 4
      %s30 = sphi 0, %s32
      %s33 = sphi 0, %s30
      %s34 = sphi 0, %s33
      %s50 = sphi 0, %s34
      %s54 = sphi 0, %s54
      %s56 = sphi 0, %s54
      %s57 = sphi 0, %s56
      %s71 = sphi 0, %s57
      %s75 = sphi 0, %s75
      %s77 = sphi 0, %s75
      %s78 = sphi 0, %s77
      %s92 = sphi 0, %s78
      %s96 = sphi 0, %s96
      %s98 = sphi 0, %s96
      %s99 = sphi 0, %s98
      %s113 = sphi 0, %s99
      %s117 = sphi 0, %s117
      %s119 = sphi 0, %s117
      %s120 = sphi 0, %s119
      %s134 = sphi 0, %s120
      %s138 = sphi 0, %s138
      %s140 = sphi 0, %s138
      %s141 = sphi 0, %s140
      %s155 = sphi 0, %s141
      %s161 = sphi 0, %s163
      %s164 = sphi 0, %s161
      %s165 = sphi 0, %s164
      %s181 = sphi 0, %s165
    $region4: #{tpu_custom_call.1} parent=1 // loop_header_branch
      %23 = sbr.rel (%p21) target = $region8
    $region5: #{tpu_custom_call.1} parent=1 // loop_body
      %s25 = ssub.s32 %s20, 1
      %s26 = ssub.s32 %s20, 2
      %s27 = sadd.s32 %s20, 1
      %s28 = ssub.s32 %s20, %s27
      %p29 = scmp.eq.s32.totalorder %s28, 0
      %s31 = sadd.s32 %s30, 1
      %s32 = scalar_select %p29, %s30, %s31
      %p35 = pneg %p29
      %p36 = scmp.eq.s32.totalorder %s20, 1
      %p37 = por %p35, %p36
      %p38 = scmp.ne.s32.totalorder %s30, %s33
      %p39 = scmp.eq.s32.totalorder %s20, 0
      %p40 = por %p38, %p39
      %p41 = scmp.ne.s32.totalorder %s30, %s33
      %p42 = scmp.eq.s32.totalorder %s25, 1
      %p43 = por %p41, %p42
      %p44 = scmp.ne.s32.totalorder %s33, %s34
      %p45 = scmp.eq.s32.totalorder %s25, 0
      %p46 = por %p44, %p45
      %p47 = scmp.ne.s32.totalorder %s33, %s34
      %p48 = scmp.eq.s32.totalorder %s26, 1
      %p49 = por %p47, %p48
      %p51 = scmp.ne.s32.totalorder %s34, %s50
      %p52 = scmp.eq.s32.totalorder %s26, 0
      %p53 = por %p51, %p52
      %s55 = sadd.s32 %s54, 1
      %p58 = scmp.eq.s32.totalorder %s20, 1
      %p59 = scmp.ne.s32.totalorder %s54, %s56
      %p60 = scmp.eq.s32.totalorder %s20, 0
      %p61 = por %p59, %p60
      %p62 = scmp.ne.s32.totalorder %s54, %s56
      %p63 = scmp.eq.s32.totalorder %s25, 1
      %p64 = por %p62, %p63
      %p65 = scmp.ne.s32.totalorder %s56, %s57
      %p66 = scmp.eq.s32.totalorder %s25, 0
      %p67 = por %p65, %p66
      %p68 = scmp.ne.s32.totalorder %s56, %s57
      %p69 = scmp.eq.s32.totalorder %s26, 1
      %p70 = por %p68, %p69
      %p72 = scmp.ne.s32.totalorder %s57, %s71
      %p73 = scmp.eq.s32.totalorder %s26, 0
      %p74 = por %p72, %p73
      %s76 = sadd.s32 %s75, 1
      %p79 = scmp.eq.s32.totalorder %s20, 1
      %p80 = scmp.ne.s32.totalorder %s75, %s77
      %p81 = scmp.eq.s32.totalorder %s20, 0
      %p82 = por %p80, %p81
      %p83 = scmp.ne.s32.totalorder %s75, %s77
      %p84 = scmp.eq.s32.totalorder %s25, 1
      %p85 = por %p83, %p84
      %p86 = scmp.ne.s32.totalorder %s77, %s78
      %p87 = scmp.eq.s32.totalorder %s25, 0
      %p88 = por %p86, %p87
      %p89 = scmp.ne.s32.totalorder %s77, %s78
      %p90 = scmp.eq.s32.totalorder %s26, 1
      %p91 = por %p89, %p90
      %p93 = scmp.ne.s32.totalorder %s78, %s92
      %p94 = scmp.eq.s32.totalorder %s26, 0
      %p95 = por %p93, %p94
      %s97 = sadd.s32 %s96, 1
      %p100 = scmp.eq.s32.totalorder %s20, 1
      %p101 = scmp.ne.s32.totalorder %s96, %s98
      %p102 = scmp.eq.s32.totalorder %s20, 0
      %p103 = por %p101, %p102
      %p104 = scmp.ne.s32.totalorder %s96, %s98
      %p105 = scmp.eq.s32.totalorder %s25, 1
      %p106 = por %p104, %p105
      %p107 = scmp.ne.s32.totalorder %s98, %s99
      %p108 = scmp.eq.s32.totalorder %s25, 0
      %p109 = por %p107, %p108
      %p110 = scmp.ne.s32.totalorder %s98, %s99
      %p111 = scmp.eq.s32.totalorder %s26, 1
      %p112 = por %p110, %p111
      %p114 = scmp.ne.s32.totalorder %s99, %s113
      %p115 = scmp.eq.s32.totalorder %s26, 0
      %p116 = por %p114, %p115
      %s118 = sadd.s32 %s117, 1
      %p121 = scmp.eq.s32.totalorder %s20, 1
      %p122 = scmp.ne.s32.totalorder %s117, %s119
      %p123 = scmp.eq.s32.totalorder %s20, 0
      %p124 = por %p122, %p123
      %p125 = scmp.ne.s32.totalorder %s117, %s119
      %p126 = scmp.eq.s32.totalorder %s25, 1
      %p127 = por %p125, %p126
      %p128 = scmp.ne.s32.totalorder %s119, %s120
      %p129 = scmp.eq.s32.totalorder %s25, 0
      %p130 = por %p128, %p129
      %p131 = scmp.ne.s32.totalorder %s119, %s120
      %p132 = scmp.eq.s32.totalorder %s26, 1
      %p133 = por %p131, %p132
      %p135 = scmp.ne.s32.totalorder %s120, %s134
      %p136 = scmp.eq.s32.totalorder %s26, 0
      %p137 = por %p135, %p136
      %s139 = sadd.s32 %s138, 1
      %p142 = scmp.eq.s32.totalorder %s20, 1
      %p143 = scmp.ne.s32.totalorder %s138, %s140
      %p144 = scmp.eq.s32.totalorder %s20, 0
      %p145 = por %p143, %p144
      %p146 = scmp.ne.s32.totalorder %s138, %s140
      %p147 = scmp.eq.s32.totalorder %s25, 1
      %p148 = por %p146, %p147
      %p149 = scmp.ne.s32.totalorder %s140, %s141
      %p150 = scmp.eq.s32.totalorder %s25, 0
      %p151 = por %p149, %p150
      %p152 = scmp.ne.s32.totalorder %s140, %s141
      %p153 = scmp.eq.s32.totalorder %s26, 1
      %p154 = por %p152, %p153
      %p156 = scmp.ne.s32.totalorder %s141, %s155
      %p157 = scmp.eq.s32.totalorder %s26, 0
      %p158 = por %p156, %p157
      %s159 = ssub.s32 %s20, %s27
      %p160 = scmp.eq.s32.totalorder %s159, 0
      %s162 = sadd.s32 %s161, 1
      %s163 = scalar_select %p160, %s161, %s162
      %p166 = pneg %p160
      %p167 = scmp.eq.s32.totalorder %s20, 1
      %p168 = por %p166, %p167
      %p169 = scmp.ne.s32.totalorder %s161, %s164
      %p170 = scmp.eq.s32.totalorder %s20, 0
      %p171 = por %p169, %p170
      %p172 = scmp.ne.s32.totalorder %s161, %s164
      %p173 = scmp.eq.s32.totalorder %s25, 1
      %p174 = por %p172, %p173
      %p175 = scmp.ne.s32.totalorder %s164, %s165
      %p176 = scmp.eq.s32.totalorder %s25, 0
      %p177 = por %p175, %p176
      %p178 = scmp.ne.s32.totalorder %s164, %s165
      %p179 = scmp.eq.s32.totalorder %s26, 1
      %p180 = por %p178, %p179
      %p182 = scmp.ne.s32.totalorder %s165, %s181
      %p183 = scmp.eq.s32.totalorder %s26, 0
      %p184 = por %p182, %p183
      %p185 = scmp.le.s32.totalorder 1, %s20
      %p186 = scmp.lt.s32.totalorder %s20, 3
      %p187 = pnand %p185, %p186
      %p188 = pneg %p187
      // Predicated region
      $region9: #{tpu_custom_call.1} parent=5 // pred_check
        _
      $region10: #{tpu_custom_call.1} parent=5 // pred_check_branch
        %190 = sbr.rel (%p187) target = $region12
      $region11: #{tpu_custom_call.1} parent=5 // pred_region
        %s191 = ssub.s32 %s20, 1
        // Predicated region
        $region13: #{tpu_custom_call.1} parent=11 // pred_check
          %p192 = pneg %p67
        $region14: #{tpu_custom_call.1} parent=11 // pred_check_branch
          %194 = sbr.rel (%p192) target = $region16
        $region15: #{tpu_custom_call.1} parent=11 // pred_region
          %s196 = ssub.s32 3072, 3072
          %197 = vsyncadd [#allocation6], %s196
          %s198 = sshll.u32 [#allocation5], 4
          %s199 = int_to_ptr.vmem [resolvable:$true] %s198
          %204 = dma.hbm_to_vmem [thread:$0]  %s1, 3072, %s199, [#allocation6], 64, 64, 4
        $region16: #{tpu_custom_call.1} parent=11 // pred_fallthru
          _
        // Predicated region
        $region17: #{tpu_custom_call.1} parent=11 // pred_check
          %p205 = pneg %p88
        $region18: #{tpu_custom_call.1} parent=11 // pred_check_branch
          %207 = sbr.rel (%p205) target = $region20
        $region19: #{tpu_custom_call.1} parent=11 // pred_region
          _
        $region20: #{tpu_custom_call.1} parent=11 // pred_fallthru
          _
        // Predicated region
        $region21: #{tpu_custom_call.1} parent=11 // pred_check
          %p208 = pneg %p109
        $region22: #{tpu_custom_call.1} parent=11 // pred_check_branch
          %210 = sbr.rel (%p208) target = $region24
        $region23: #{tpu_custom_call.1} parent=11 // pred_region
          %s212 = ssub.s32 6144, 6144
          %213 = vsyncadd [#allocation6], %s212
          %s214 = sshll.u32 [#allocation7], 4
          %s215 = int_to_ptr.vmem [resolvable:$true] %s214
          %220 = dma.hbm_to_vmem [thread:$0]  %s3, 6144, %s215, [#allocation6], 128, 128, 8
        $region24: #{tpu_custom_call.1} parent=11 // pred_fallthru
          _
        // Predicated region
        $region25: #{tpu_custom_call.1} parent=11 // pred_check
          %p221 = pneg %p130
        $region26: #{tpu_custom_call.1} parent=11 // pred_check_branch
          %223 = sbr.rel (%p221) target = $region28
        $region27: #{tpu_custom_call.1} parent=11 // pred_region
          _
        $region28: #{tpu_custom_call.1} parent=11 // pred_fallthru
          _
        // Predicated region
        $region29: #{tpu_custom_call.1} parent=11 // pred_check
          %p224 = pneg %p151
        $region30: #{tpu_custom_call.1} parent=11 // pred_check_branch
          %226 = sbr.rel (%p224) target = $region32
        $region31: #{tpu_custom_call.1} parent=11 // pred_region
          %s228 = ssub.s32 4096, 4096
          %229 = vsyncadd [#allocation9], %s228
          %s230 = sshll.u32 [#allocation8], 4
          %s231 = int_to_ptr.vmem [resolvable:$true] %s230
          %236 = dma.hbm_to_vmem [thread:$0]  %s5, 4096, %s231, [#allocation9], 128, 128, 8
        $region32: #{tpu_custom_call.1} parent=11 // pred_fallthru
          _
      $region12: #{tpu_custom_call.1} parent=5 // pred_fallthru
        _
      %p237 = scmp.lt.s32.totalorder %s20, 2
      // Predicated region
      $region33: #{tpu_custom_call.1} parent=5 // pred_check
        %p238 = pneg %p237
      $region34: #{tpu_custom_call.1} parent=5 // pred_check_branch
        %240 = sbr.rel (%p238) target = $region36
      $region35: #{tpu_custom_call.1} parent=5 // pred_region
        // Predicated region
        $region37: #{tpu_custom_call.1} parent=35 // pred_check
          %p241 = pneg %p40
        $region38: #{tpu_custom_call.1} parent=35 // pred_check_branch
          %243 = sbr.rel (%p241) target = $region40
        $region39: #{tpu_custom_call.1} parent=35 // pred_region
          %s244 = sand.u32 %s30, 1
          %s245 = scalar_lea.sflag [#allocation3], %s244
          %s246 = sand.u32 %s30, 1
          %s247 = smul.addr %s246, 16
          %s248 = scalar_lea.vmem [#allocation2], %s247
          %s250 = ssub.s32 256, 256
          %251 = vsyncadd %s245, %s250
          %s252 = smul.addr %s20, 2
          %s253 = smul.addr %s252, 128
          %s254 = scalar_lea.hbm %s0, %s253
          %s256 = sshll.u32 %s248, 4
          %s257 = int_to_ptr.vmem [resolvable:$true] %s256
          %259 = dma.hbm_to_vmem [thread:$0]  %s254, 256, %s257, %s245
        $region40: #{tpu_custom_call.1} parent=35 // pred_fallthru
          _
      $region36: #{tpu_custom_call.1} parent=5 // pred_fallthru
        _
      %p260 = scmp.le.s32.totalorder 1, %s20
      %p261 = scmp.lt.s32.totalorder %s20, 3
      %p262 = pnand %p260, %p261
      %p263 = pneg %p262
      // Predicated region
      $region41: #{tpu_custom_call.1} parent=5 // pred_check
        _
      $region42: #{tpu_custom_call.1} parent=5 // pred_check_branch
        %265 = sbr.rel (%p262) target = $region44
      $region43: #{tpu_custom_call.1} parent=5 // pred_region
        %s266 = ssub.s32 %s20, 1
        %s267 = sand.u32 %s33, 1
        %s268 = scalar_lea.sflag [#allocation3], %s267
        %s269 = sand.u32 %s33, 1
        %s270 = smul.addr %s269, 16
        %s271 = scalar_lea.vmem [#allocation2], %s270
        // Predicated region
        $region45: #{tpu_custom_call.1} parent=43 // pred_check
          %p272 = pneg %p46
        $region46: #{tpu_custom_call.1} parent=43 // pred_check_branch
          %274 = sbr.rel (%p272) target = $region48
        $region47: #{tpu_custom_call.1} parent=43 // pred_region
          %275 = dma.done %s268, 256
        $region48: #{tpu_custom_call.1} parent=43 // pred_fallthru
          _
        // Predicated region
        $region49: #{tpu_custom_call.1} parent=43 // pred_check
          %p276 = pneg %p67
        $region50: #{tpu_custom_call.1} parent=43 // pred_check_branch
          %278 = sbr.rel (%p276) target = $region52
        $region51: #{tpu_custom_call.1} parent=43 // pred_region
          %279 = dma.done [#allocation6], 3072
        $region52: #{tpu_custom_call.1} parent=43 // pred_fallthru
          _
        // Predicated region
        $region53: #{tpu_custom_call.1} parent=43 // pred_check
          %p280 = pneg %p109
        $region54: #{tpu_custom_call.1} parent=43 // pred_check_branch
          %282 = sbr.rel (%p280) target = $region56
        $region55: #{tpu_custom_call.1} parent=43 // pred_region
          %283 = dma.done [#allocation6], 6144
        $region56: #{tpu_custom_call.1} parent=43 // pred_fallthru
          _
        // Predicated region
        $region57: #{tpu_custom_call.1} parent=43 // pred_check
          %p284 = pneg %p151
        $region58: #{tpu_custom_call.1} parent=43 // pred_check_branch
          %286 = sbr.rel (%p284) target = $region60
        $region59: #{tpu_custom_call.1} parent=43 // pred_region
          %287 = dma.done [#allocation9], 4096
        $region60: #{tpu_custom_call.1} parent=43 // pred_fallthru
          _
        %s288 = sand.u32 %s33, 1
        %s289 = scalar_lea.sflag [#allocation3], %s288
        %s290 = sand.u32 %s33, 1
        %s291 = smul.addr %s290, 16
        %s292 = scalar_lea.vmem [#allocation2], %s291
        %p293 = pneg %p46
        %p294 = pneg %p43
        %p295 = pneg %p67
        %p296 = pneg %p64
        %p297 = pneg %p88
        %p298 = pneg %p85
        %p299 = pneg %p109
        %p300 = pneg %p106
        %p301 = pneg %p130
        %p302 = pneg %p127
        %p303 = pneg %p151
        %p304 = pneg %p148
        %p305 = pneg %p177
        %p306 = pneg %p174
        %s307 = sand.u32 %s164, 1
        %s308 = scalar_lea.sflag [#allocation4], %s307
        %s309 = sand.u32 %s164, 1
        %s310 = smul.addr %s309, 16
        %s311 = scalar_lea.vmem [#allocation10], %s310
        %v313 = vld [vmem:[%s271] sm:$0xff]
        %v314 = vld [vmem:[%s271 + $0x8] sm:$0xff]
        %v315 = vpack.c.bf16 %v314, %v314
        %s316 = scalar_lea.vmem [#allocation5], 128
        %v317 = vld [vmem:[%s316] sm:$0xf]
        %v318 = vld [vmem:[%s316 + $0x4] sm:$0xf]
        %v319 = vld [vmem:[%s316 + $0x8] sm:$0xf]
        %v320 = vld [vmem:[%s316 + $0xc] sm:$0xf]
        %v321 = vld [vmem:[%s316 + $0x10] sm:$0xf]
        %v322 = vld [vmem:[%s316 + $0x14] sm:$0xf]
        %v323 = vld [vmem:[%s316 + $0x18] sm:$0xf]
        %v324 = vld [vmem:[%s316 + $0x1c] sm:$0xf]
        %v325 = vld [vmem:[%s316 + $0x20] sm:$0xf]
        %v326 = vld [vmem:[%s316 + $0x24] sm:$0xf]
        %v327 = vld [vmem:[%s316 + $0x28] sm:$0xf]
        %v328 = vld [vmem:[%s316 + $0x2c] sm:$0xf]
        %v329 = vld [vmem:[%s316 + $0x30] sm:$0xf]
        %v330 = vld [vmem:[%s316 + $0x34] sm:$0xf]
        %v331 = vld [vmem:[%s316 + $0x38] sm:$0xf]
        %v332 = vld [vmem:[%s316 + $0x3c] sm:$0xf]
        %s333 = scalar_lea.vmem %s2, 2
        %v334 = vld [vmem:[%s333] sm:$0x1]
        %v336 = vlaneseq
        %v337 = vshrl.u32 %v336, 7
        %v338 = vsub.s32 0, %v337
        %v339 = vrot.slane %v334, %v338
        %v357 = vunpack.c.l.b16 %v317
        %v358 = vunpack.c.l.b16 %v318
        %v359 = vunpack.c.l.b16 %v319
        %v360 = vunpack.c.l.b16 %v320
        %v361 = vunpack.c.l.b16 %v321
        %v362 = vunpack.c.l.b16 %v322
        %v363 = vunpack.c.l.b16 %v323
        %v364 = vunpack.c.l.b16 %v324
        %v365 = vunpack.c.l.b16 %v325
        %v366 = vunpack.c.l.b16 %v326
        %v367 = vunpack.c.l.b16 %v327
        %v368 = vunpack.c.l.b16 %v328
        %v369 = vunpack.c.l.b16 %v329
        %v370 = vunpack.c.l.b16 %v330
        %v371 = vunpack.c.l.b16 %v331
        %v372 = vunpack.c.l.b16 %v332
        %v373 = vpack.c.b16 %v358, %v357
        %v374 = vpack.c.b16 %v360, %v359
        %v375 = vpack.c.b16 %v362, %v361
        %v376 = vpack.c.b16 %v364, %v363
        %v377 = vpack.c.b16 %v366, %v365
        %v378 = vpack.c.b16 %v368, %v367
        %v379 = vpack.c.b16 %v370, %v369
        %v380 = vpack.c.b16 %v372, %v371
        %389 = vmatprep.subr.bf16.mxu0 0
        %390 = vmatpush1.bf16.msra.mxu0 %v373
        %391 = vmatprep.subr.bf16.mxu0 0
        %392 = vmatpush1.bf16.msra.mxu0 %v374
        %393 = vmatprep.subr.bf16.mxu0 0
        %394 = vmatpush1.bf16.msra.mxu0 %v375
        %395 = vmatprep.subr.bf16.mxu0 0
        %396 = vmatpush1.bf16.msra.mxu0 %v376
        %397 = vmatprep.subr.bf16.mxu0 0
        %398 = vmatpush1.bf16.msra.mxu0 %v377
        %399 = vmatprep.subr.bf16.mxu0 0
        %400 = vmatpush1.bf16.msra.mxu0 %v378
        %401 = vmatprep.subr.bf16.mxu0 0
        %402 = vmatpush1.bf16.msra.mxu0 %v379
        %403 = vmatprep.subr.bf16.mxu0 0
        %404 = vmatpush1.bf16.msra.mxu0 %v380
        %405 = vmatprep.subr.bf16.mxu0 0
        %406 = vmatpush1.bf16.msra.mxu0 0
        %407 = vmatprep.subr.bf16.mxu0 0
        %408 = vmatpush1.bf16.msra.mxu0 0
        %409 = vmatprep.subr.bf16.mxu0 0
        %410 = vmatpush1.bf16.msra.mxu0 0
        %411 = vmatprep.subr.bf16.mxu0 0
        %412 = vmatpush1.bf16.msra.mxu0 0
        %413 = vmatprep.subr.bf16.mxu0 0
        %414 = vmatpush1.bf16.msra.mxu0 0
        %415 = vmatprep.subr.bf16.mxu0 0
        %416 = vmatpush1.bf16.msra.mxu0 0
        %417 = vmatprep.subr.bf16.mxu0 0
        %418 = vmatpush1.bf16.msra.mxu0 0
        %419 = vmatprep.subr.bf16.mxu0 0
        %420 = vmatpush1.bf16.msra.mxu0 0
        %421 = vmatprep.mubr.bf16.mxu0 0
        %422 = vmatmul.mubr.bf16.gmra.mrb[0].mxu0 %v315
        %v423 = vpop.f32.mrb[0].mxu0
        %v424 = vadd.f32 %v339, %v423
        %v425 = vpop.f32.mrb[0].mxu0
        %v426 = vpop.f32.mrb[0].mxu0
        %v427 = vpop.f32.mrb[0].mxu0
        %428 = vdwg.mxu0
        %v429 = vtanh.pop %v424
        %v430 = vpack.c.bf16 %v429, %v429
        %s431 = scalar_lea.vmem [#allocation7], 256
        %v432 = vld [vmem:[%s431] sm:$0xff]
        %v433 = vld [vmem:[%s431 + $0x8] sm:$0xff]
        %v434 = vld [vmem:[%s431 + $0x10] sm:$0xff]
        %v435 = vld [vmem:[%s431 + $0x18] sm:$0xff]
        %v436 = vld [vmem:[%s431 + $0x20] sm:$0xff]
        %v437 = vld [vmem:[%s431 + $0x28] sm:$0xff]
        %v438 = vld [vmem:[%s431 + $0x30] sm:$0xff]
        %v439 = vld [vmem:[%s431 + $0x38] sm:$0xff]
        %v440 = vld [vmem:[%s431 + $0x40] sm:$0xff]
        %v441 = vld [vmem:[%s431 + $0x48] sm:$0xff]
        %v442 = vld [vmem:[%s431 + $0x50] sm:$0xff]
        %v443 = vld [vmem:[%s431 + $0x58] sm:$0xff]
        %v444 = vld [vmem:[%s431 + $0x60] sm:$0xff]
        %v445 = vld [vmem:[%s431 + $0x68] sm:$0xff]
        %v446 = vld [vmem:[%s431 + $0x70] sm:$0xff]
        %v447 = vld [vmem:[%s431 + $0x78] sm:$0xff]
        %s448 = scalar_lea.vmem %s4, 4
        %v449 = vld [vmem:[%s448] sm:$0x3]
        %v451 = vlaneseq
        %v452 = vshrl.u32 %v451, 7
        %v453 = vsub.s32 0, %v452
        %v454 = vrot.slane %v449, %v453
        %v455 = vlaneseq
        %v456 = vshrl.u32 %v455, 7
        %v457 = vsub.s32 1, %v456
        %v458 = vrot.slane %v449, %v457
        %v477 = vunpack.c.l.b16 %v432
        %v478 = vunpack.c.h.b16 %v432
        %v479 = vunpack.c.l.b16 %v433
        %v480 = vunpack.c.h.b16 %v433
        %v481 = vunpack.c.l.b16 %v434
        %v482 = vunpack.c.h.b16 %v434
        %v483 = vunpack.c.l.b16 %v435
        %v484 = vunpack.c.h.b16 %v435
        %v485 = vunpack.c.l.b16 %v436
        %v486 = vunpack.c.h.b16 %v436
        %v487 = vunpack.c.l.b16 %v437
        %v488 = vunpack.c.h.b16 %v437
        %v489 = vunpack.c.l.b16 %v438
        %v490 = vunpack.c.h.b16 %v438
        %v491 = vunpack.c.l.b16 %v439
        %v492 = vunpack.c.h.b16 %v439
        %v493 = vunpack.c.l.b16 %v440
        %v494 = vunpack.c.h.b16 %v440
        %v495 = vunpack.c.l.b16 %v441
        %v496 = vunpack.c.h.b16 %v441
        %v497 = vunpack.c.l.b16 %v442
        %v498 = vunpack.c.h.b16 %v442
        %v499 = vunpack.c.l.b16 %v443
        %v500 = vunpack.c.h.b16 %v443
        %v501 = vunpack.c.l.b16 %v444
        %v502 = vunpack.c.h.b16 %v444
        %v503 = vunpack.c.l.b16 %v445
        %v504 = vunpack.c.h.b16 %v445
        %v505 = vunpack.c.l.b16 %v446
        %v506 = vunpack.c.h.b16 %v446
        %v507 = vunpack.c.l.b16 %v447
        %v508 = vunpack.c.h.b16 %v447
        %v509 = vpack.c.b16 %v479, %v477
        %v510 = vpack.c.b16 %v480, %v478
        %v511 = vpack.c.b16 %v483, %v481
        %v512 = vpack.c.b16 %v484, %v482
        %v513 = vpack.c.b16 %v487, %v485
        %v514 = vpack.c.b16 %v488, %v486
        %v515 = vpack.c.b16 %v491, %v489
        %v516 = vpack.c.b16 %v492, %v490
        %v517 = vpack.c.b16 %v495, %v493
        %v518 = vpack.c.b16 %v496, %v494
        %v519 = vpack.c.b16 %v499, %v497
        %v520 = vpack.c.b16 %v500, %v498
        %v521 = vpack.c.b16 %v503, %v501
        %v522 = vpack.c.b16 %v504, %v502
        %v523 = vpack.c.b16 %v507, %v505
        %v524 = vpack.c.b16 %v508, %v506
        %541 = vmatprep.subr.bf16.mxu0 %v510
        %542 = vmatpush1.bf16.msra.mxu0 %v509
        %543 = vmatprep.subr.bf16.mxu0 %v512
        %544 = vmatpush1.bf16.msra.mxu0 %v511
        %545 = vmatprep.subr.bf16.mxu0 %v514
        %546 = vmatpush1.bf16.msra.mxu0 %v513
        %547 = vmatprep.subr.bf16.mxu0 %v516
        %548 = vmatpush1.bf16.msra.mxu0 %v515
        %549 = vmatprep.subr.bf16.mxu0 %v518
        %550 = vmatpush1.bf16.msra.mxu0 %v517
        %551 = vmatprep.subr.bf16.mxu0 %v520
        %552 = vmatpush1.bf16.msra.mxu0 %v519
        %553 = vmatprep.subr.bf16.mxu0 %v522
        %554 = vmatpush1.bf16.msra.mxu0 %v521
        %555 = vmatprep.subr.bf16.mxu0 %v524
        %556 = vmatpush1.bf16.msra.mxu0 %v523
        %557 = vmatprep.subr.bf16.mxu0 0
        %558 = vmatpush1.bf16.msra.mxu0 0
        %559 = vmatprep.subr.bf16.mxu0 0
        %560 = vmatpush1.bf16.msra.mxu0 0
        %561 = vmatprep.subr.bf16.mxu0 0
        %562 = vmatpush1.bf16.msra.mxu0 0
        %563 = vmatprep.subr.bf16.mxu0 0
        %564 = vmatpush1.bf16.msra.mxu0 0
        %565 = vmatprep.subr.bf16.mxu0 0
        %566 = vmatpush1.bf16.msra.mxu0 0
        %567 = vmatprep.subr.bf16.mxu0 0
        %568 = vmatpush1.bf16.msra.mxu0 0
        %569 = vmatprep.subr.bf16.mxu0 0
        %570 = vmatpush1.bf16.msra.mxu0 0
        %571 = vmatprep.subr.bf16.mxu0 0
        %572 = vmatpush1.bf16.msra.mxu0 0
        %573 = vmatprep.mubr.bf16.mxu0 0
        %574 = vmatmul.mubr.bf16.gmra.mrb[0].mxu0 %v430
        %v575 = vpop.f32.mrb[0].mxu0
        %v576 = vadd.f32 %v454, %v575
        %v577 = vpop.f32.mrb[0].mxu0
        %v578 = vadd.f32 %v458, %v577
        %v579 = vpop.f32.mrb[0].mxu0
        %v580 = vpop.f32.mrb[0].mxu0
        %581 = vdwg.mxu0
        %v582 = vtanh.pop %v576
        %v583 = vsub.f32 %v313, %v578
        %v584 = vsub.f32 0.0, %v582
        %v585 = vmul.f32 %v584, 1.442695
        %v586 = vpow.pop %v585
        %v587 = vmul.f32 %v583, %v586
        %v588 = vpack.c.bf16 %v587, %v587
        %s589 = scalar_lea.vmem [#allocation5], 64
        %v590 = vld [vmem:[%s589] sm:$0xf]
        %v591 = vld [vmem:[%s589 + $0x4] sm:$0xf]
        %v592 = vld [vmem:[%s589 + $0x8] sm:$0xf]
        %v593 = vld [vmem:[%s589 + $0xc] sm:$0xf]
        %v594 = vld [vmem:[%s589 + $0x10] sm:$0xf]
        %v595 = vld [vmem:[%s589 + $0x14] sm:$0xf]
        %v596 = vld [vmem:[%s589 + $0x18] sm:$0xf]
        %v597 = vld [vmem:[%s589 + $0x1c] sm:$0xf]
        %v598 = vld [vmem:[%s589 + $0x20] sm:$0xf]
        %v599 = vld [vmem:[%s589 + $0x24] sm:$0xf]
        %v600 = vld [vmem:[%s589 + $0x28] sm:$0xf]
        %v601 = vld [vmem:[%s589 + $0x2c] sm:$0xf]
        %v602 = vld [vmem:[%s589 + $0x30] sm:$0xf]
        %v603 = vld [vmem:[%s589 + $0x34] sm:$0xf]
        %v604 = vld [vmem:[%s589 + $0x38] sm:$0xf]
        %v605 = vld [vmem:[%s589 + $0x3c] sm:$0xf]
        %s606 = scalar_lea.vmem %s2, 1
        %v607 = vld [vmem:[%s606] sm:$0x1]
        %v609 = vlaneseq
        %v610 = vshrl.u32 %v609, 7
        %v611 = vsub.s32 0, %v610
        %v612 = vrot.slane %v607, %v611
        %v630 = vunpack.c.l.b16 %v590
        %v631 = vunpack.c.l.b16 %v591
        %v632 = vunpack.c.l.b16 %v592
        %v633 = vunpack.c.l.b16 %v593
        %v634 = vunpack.c.l.b16 %v594
        %v635 = vunpack.c.l.b16 %v595
        %v636 = vunpack.c.l.b16 %v596
        %v637 = vunpack.c.l.b16 %v597
        %v638 = vunpack.c.l.b16 %v598
        %v639 = vunpack.c.l.b16 %v599
        %v640 = vunpack.c.l.b16 %v600
        %v641 = vunpack.c.l.b16 %v601
        %v642 = vunpack.c.l.b16 %v602
        %v643 = vunpack.c.l.b16 %v603
        %v644 = vunpack.c.l.b16 %v604
        %v645 = vunpack.c.l.b16 %v605
        %v646 = vpack.c.b16 %v631, %v630
        %v647 = vpack.c.b16 %v633, %v632
        %v648 = vpack.c.b16 %v635, %v634
        %v649 = vpack.c.b16 %v637, %v636
        %v650 = vpack.c.b16 %v639, %v638
        %v651 = vpack.c.b16 %v641, %v640
        %v652 = vpack.c.b16 %v643, %v642
        %v653 = vpack.c.b16 %v645, %v644
        %662 = vmatprep.subr.bf16.mxu0 0
        %663 = vmatpush1.bf16.msra.mxu0 %v646
        %664 = vmatprep.subr.bf16.mxu0 0
        %665 = vmatpush1.bf16.msra.mxu0 %v647
        %666 = vmatprep.subr.bf16.mxu0 0
        %667 = vmatpush1.bf16.msra.mxu0 %v648
        %668 = vmatprep.subr.bf16.mxu0 0
        %669 = vmatpush1.bf16.msra.mxu0 %v649
        %670 = vmatprep.subr.bf16.mxu0 0
        %671 = vmatpush1.bf16.msra.mxu0 %v650
        %672 = vmatprep.subr.bf16.mxu0 0
        %673 = vmatpush1.bf16.msra.mxu0 %v651
        %674 = vmatprep.subr.bf16.mxu0 0
        %675 = vmatpush1.bf16.msra.mxu0 %v652
        %676 = vmatprep.subr.bf16.mxu0 0
        %677 = vmatpush1.bf16.msra.mxu0 %v653
        %678 = vmatprep.subr.bf16.mxu0 0
        %679 = vmatpush1.bf16.msra.mxu0 0
        %680 = vmatprep.subr.bf16.mxu0 0
        %681 = vmatpush1.bf16.msra.mxu0 0
        %682 = vmatprep.subr.bf16.mxu0 0
        %683 = vmatpush1.bf16.msra.mxu0 0
        %684 = vmatprep.subr.bf16.mxu0 0
        %685 = vmatpush1.bf16.msra.mxu0 0
        %686 = vmatprep.subr.bf16.mxu0 0
        %687 = vmatpush1.bf16.msra.mxu0 0
        %688 = vmatprep.subr.bf16.mxu0 0
        %689 = vmatpush1.bf16.msra.mxu0 0
        %690 = vmatprep.subr.bf16.mxu0 0
        %691 = vmatpush1.bf16.msra.mxu0 0
        %692 = vmatprep.subr.bf16.mxu0 0
        %693 = vmatpush1.bf16.msra.mxu0 0
        %694 = vmatprep.mubr.bf16.mxu0 0
        %695 = vmatmul.mubr.bf16.gmra.mrb[0].mxu0 %v588
        %v696 = vpop.f32.mrb[0].mxu0
        %v697 = vadd.f32 %v612, %v696
        %v698 = vpop.f32.mrb[0].mxu0
        %v699 = vpop.f32.mrb[0].mxu0
        %v700 = vpop.f32.mrb[0].mxu0
        %701 = vdwg.mxu0
        %v702 = vtanh.pop %v697
        %v703 = vpack.c.bf16 %v702, %v702
        %s704 = scalar_lea.vmem [#allocation7], 128
        %v705 = vld [vmem:[%s704] sm:$0xff]
        %v706 = vld [vmem:[%s704 + $0x8] sm:$0xff]
        %v707 = vld [vmem:[%s704 + $0x10] sm:$0xff]
        %v708 = vld [vmem:[%s704 + $0x18] sm:$0xff]
        %v709 = vld [vmem:[%s704 + $0x20] sm:$0xff]
        %v710 = vld [vmem:[%s704 + $0x28] sm:$0xff]
        %v711 = vld [vmem:[%s704 + $0x30] sm:$0xff]
        %v712 = vld [vmem:[%s704 + $0x38] sm:$0xff]
        %v713 = vld [vmem:[%s704 + $0x40] sm:$0xff]
        %v714 = vld [vmem:[%s704 + $0x48] sm:$0xff]
        %v715 = vld [vmem:[%s704 + $0x50] sm:$0xff]
        %v716 = vld [vmem:[%s704 + $0x58] sm:$0xff]
        %v717 = vld [vmem:[%s704 + $0x60] sm:$0xff]
        %v718 = vld [vmem:[%s704 + $0x68] sm:$0xff]
        %v719 = vld [vmem:[%s704 + $0x70] sm:$0xff]
        %v720 = vld [vmem:[%s704 + $0x78] sm:$0xff]
        %s721 = scalar_lea.vmem %s4, 2
        %v722 = vld [vmem:[%s721] sm:$0x3]
        %v724 = vlaneseq
        %v725 = vshrl.u32 %v724, 7
        %v726 = vsub.s32 0, %v725
        %v727 = vrot.slane %v722, %v726
        %v728 = vlaneseq
        %v729 = vshrl.u32 %v728, 7
        %v730 = vsub.s32 1, %v729
        %v731 = vrot.slane %v722, %v730
        %v750 = vunpack.c.l.b16 %v705
        %v751 = vunpack.c.h.b16 %v705
        %v752 = vunpack.c.l.b16 %v706
        %v753 = vunpack.c.h.b16 %v706
        %v754 = vunpack.c.l.b16 %v707
        %v755 = vunpack.c.h.b16 %v707
        %v756 = vunpack.c.l.b16 %v708
        %v757 = vunpack.c.h.b16 %v708
        %v758 = vunpack.c.l.b16 %v709
        %v759 = vunpack.c.h.b16 %v709
        %v760 = vunpack.c.l.b16 %v710
        %v761 = vunpack.c.h.b16 %v710
        %v762 = vunpack.c.l.b16 %v711
        %v763 = vunpack.c.h.b16 %v711
        %v764 = vunpack.c.l.b16 %v712
        %v765 = vunpack.c.h.b16 %v712
        %v766 = vunpack.c.l.b16 %v713
        %v767 = vunpack.c.h.b16 %v713
        %v768 = vunpack.c.l.b16 %v714
        %v769 = vunpack.c.h.b16 %v714
        %v770 = vunpack.c.l.b16 %v715
        %v771 = vunpack.c.h.b16 %v715
        %v772 = vunpack.c.l.b16 %v716
        %v773 = vunpack.c.h.b16 %v716
        %v774 = vunpack.c.l.b16 %v717
        %v775 = vunpack.c.h.b16 %v717
        %v776 = vunpack.c.l.b16 %v718
        %v777 = vunpack.c.h.b16 %v718
        %v778 = vunpack.c.l.b16 %v719
        %v779 = vunpack.c.h.b16 %v719
        %v780 = vunpack.c.l.b16 %v720
        %v781 = vunpack.c.h.b16 %v720
        %v782 = vpack.c.b16 %v752, %v750
        %v783 = vpack.c.b16 %v753, %v751
        %v784 = vpack.c.b16 %v756, %v754
        %v785 = vpack.c.b16 %v757, %v755
        %v786 = vpack.c.b16 %v760, %v758
        %v787 = vpack.c.b16 %v761, %v759
        %v788 = vpack.c.b16 %v764, %v762
        %v789 = vpack.c.b16 %v765, %v763
        %v790 = vpack.c.b16 %v768, %v766
        %v791 = vpack.c.b16 %v769, %v767
        %v792 = vpack.c.b16 %v772, %v770
        %v793 = vpack.c.b16 %v773, %v771
        %v794 = vpack.c.b16 %v776, %v774
        %v795 = vpack.c.b16 %v777, %v775
        %v796 = vpack.c.b16 %v780, %v778
        %v797 = vpack.c.b16 %v781, %v779
        %814 = vmatprep.subr.bf16.mxu0 %v783
        %815 = vmatpush1.bf16.msra.mxu0 %v782
        %816 = vmatprep.subr.bf16.mxu0 %v785
        %817 = vmatpush1.bf16.msra.mxu0 %v784
        %818 = vmatprep.subr.bf16.mxu0 %v787
        %819 = vmatpush1.bf16.msra.mxu0 %v786
        %820 = vmatprep.subr.bf16.mxu0 %v789
        %821 = vmatpush1.bf16.msra.mxu0 %v788
        %822 = vmatprep.subr.bf16.mxu0 %v791
        %823 = vmatpush1.bf16.msra.mxu0 %v790
        %824 = vmatprep.subr.bf16.mxu0 %v793
        %825 = vmatpush1.bf16.msra.mxu0 %v792
        %826 = vmatprep.subr.bf16.mxu0 %v795
        %827 = vmatpush1.bf16.msra.mxu0 %v794
        %828 = vmatprep.subr.bf16.mxu0 %v797
        %829 = vmatpush1.bf16.msra.mxu0 %v796
        %830 = vmatprep.subr.bf16.mxu0 0
        %831 = vmatpush1.bf16.msra.mxu0 0
        %832 = vmatprep.subr.bf16.mxu0 0
        %833 = vmatpush1.bf16.msra.mxu0 0
        %834 = vmatprep.subr.bf16.mxu0 0
        %835 = vmatpush1.bf16.msra.mxu0 0
        %836 = vmatprep.subr.bf16.mxu0 0
        %837 = vmatpush1.bf16.msra.mxu0 0
        %838 = vmatprep.subr.bf16.mxu0 0
        %839 = vmatpush1.bf16.msra.mxu0 0
        %840 = vmatprep.subr.bf16.mxu0 0
        %841 = vmatpush1.bf16.msra.mxu0 0
        %842 = vmatprep.subr.bf16.mxu0 0
        %843 = vmatpush1.bf16.msra.mxu0 0
        %844 = vmatprep.subr.bf16.mxu0 0
        %845 = vmatpush1.bf16.msra.mxu0 0
        %846 = vmatprep.mubr.bf16.mxu0 0
        %847 = vmatmul.mubr.bf16.gmra.mrb[0].mxu0 %v703
        %v848 = vpop.f32.mrb[0].mxu0
        %v849 = vadd.f32 %v727, %v848
        %v850 = vpop.f32.mrb[0].mxu0
        %v851 = vadd.f32 %v731, %v850
        %v852 = vpop.f32.mrb[0].mxu0
        %v853 = vpop.f32.mrb[0].mxu0
        %854 = vdwg.mxu0
        %v855 = vtanh.pop %v849
        %v856 = vsub.f32 %v314, %v851
        %v857 = vsub.f32 0.0, %v855
        %v858 = vmul.f32 %v857, 1.442695
        %v859 = vpow.pop %v858
        %v860 = vmul.f32 %v856, %v859
        %v861 = vpack.c.bf16 %v860, %v860
        %v862 = vld [vmem:[#allocation5] sm:$0xf]
        %v863 = vld [vmem:[#allocation5 + $0x4] sm:$0xf]
        %v864 = vld [vmem:[#allocation5 + $0x8] sm:$0xf]
        %v865 = vld [vmem:[#allocation5 + $0xc] sm:$0xf]
        %v866 = vld [vmem:[#allocation5 + $0x10] sm:$0xf]
        %v867 = vld [vmem:[#allocation5 + $0x14] sm:$0xf]
        %v868 = vld [vmem:[#allocation5 + $0x18] sm:$0xf]
        %v869 = vld [vmem:[#allocation5 + $0x1c] sm:$0xf]
        %v870 = vld [vmem:[#allocation5 + $0x20] sm:$0xf]
        %v871 = vld [vmem:[#allocation5 + $0x24] sm:$0xf]
        %v872 = vld [vmem:[#allocation5 + $0x28] sm:$0xf]
        %v873 = vld [vmem:[#allocation5 + $0x2c] sm:$0xf]
        %v874 = vld [vmem:[#allocation5 + $0x30] sm:$0xf]
        %v875 = vld [vmem:[#allocation5 + $0x34] sm:$0xf]
        %v876 = vld [vmem:[#allocation5 + $0x38] sm:$0xf]
        %v877 = vld [vmem:[#allocation5 + $0x3c] sm:$0xf]
        %v878 = vld [vmem:[%s2] sm:$0x1]
        %v880 = vlaneseq
        %v881 = vshrl.u32 %v880, 7
        %v882 = vsub.s32 0, %v881
        %v883 = vrot.slane %v878, %v882
        %v901 = vunpack.c.l.b16 %v862
        %v902 = vunpack.c.l.b16 %v863
        %v903 = vunpack.c.l.b16 %v864
        %v904 = vunpack.c.l.b16 %v865
        %v905 = vunpack.c.l.b16 %v866
        %v906 = vunpack.c.l.b16 %v867
        %v907 = vunpack.c.l.b16 %v868
        %v908 = vunpack.c.l.b16 %v869
        %v909 = vunpack.c.l.b16 %v870
        %v910 = vunpack.c.l.b16 %v871
        %v911 = vunpack.c.l.b16 %v872
        %v912 = vunpack.c.l.b16 %v873
        %v913 = vunpack.c.l.b16 %v874
        %v914 = vunpack.c.l.b16 %v875
        %v915 = vunpack.c.l.b16 %v876
        %v916 = vunpack.c.l.b16 %v877
        %v917 = vpack.c.b16 %v902, %v901
        %v918 = vpack.c.b16 %v904, %v903
        %v919 = vpack.c.b16 %v906, %v905
        %v920 = vpack.c.b16 %v908, %v907
        %v921 = vpack.c.b16 %v910, %v909
        %v922 = vpack.c.b16 %v912, %v911
        %v923 = vpack.c.b16 %v914, %v913
        %v924 = vpack.c.b16 %v916, %v915
        %933 = vmatprep.subr.bf16.mxu0 0
        %934 = vmatpush1.bf16.msra.mxu0 %v917
        %935 = vmatprep.subr.bf16.mxu0 0
        %936 = vmatpush1.bf16.msra.mxu0 %v918
        %937 = vmatprep.subr.bf16.mxu0 0
        %938 = vmatpush1.bf16.msra.mxu0 %v919
        %939 = vmatprep.subr.bf16.mxu0 0
        %940 = vmatpush1.bf16.msra.mxu0 %v920
        %941 = vmatprep.subr.bf16.mxu0 0
        %942 = vmatpush1.bf16.msra.mxu0 %v921
        %943 = vmatprep.subr.bf16.mxu0 0
        %944 = vmatpush1.bf16.msra.mxu0 %v922
        %945 = vmatprep.subr.bf16.mxu0 0
        %946 = vmatpush1.bf16.msra.mxu0 %v923
        %947 = vmatprep.subr.bf16.mxu0 0
        %948 = vmatpush1.bf16.msra.mxu0 %v924
        %949 = vmatprep.subr.bf16.mxu0 0
        %950 = vmatpush1.bf16.msra.mxu0 0
        %951 = vmatprep.subr.bf16.mxu0 0
        %952 = vmatpush1.bf16.msra.mxu0 0
        %953 = vmatprep.subr.bf16.mxu0 0
        %954 = vmatpush1.bf16.msra.mxu0 0
        %955 = vmatprep.subr.bf16.mxu0 0
        %956 = vmatpush1.bf16.msra.mxu0 0
        %957 = vmatprep.subr.bf16.mxu0 0
        %958 = vmatpush1.bf16.msra.mxu0 0
        %959 = vmatprep.subr.bf16.mxu0 0
        %960 = vmatpush1.bf16.msra.mxu0 0
        %961 = vmatprep.subr.bf16.mxu0 0
        %962 = vmatpush1.bf16.msra.mxu0 0
        %963 = vmatprep.subr.bf16.mxu0 0
        %964 = vmatpush1.bf16.msra.mxu0 0
        %965 = vmatprep.mubr.bf16.mxu0 0
        %966 = vmatmul.mubr.bf16.gmra.mrb[0].mxu0 %v861
        %v967 = vpop.f32.mrb[0].mxu0
        %v968 = vadd.f32 %v883, %v967
        %v969 = vpop.f32.mrb[0].mxu0
        %v970 = vpop.f32.mrb[0].mxu0
        %v971 = vpop.f32.mrb[0].mxu0
        %972 = vdwg.mxu0
        %v973 = vtanh.pop %v968
        %v974 = vpack.c.bf16 %v973, %v973
        %v975 = vld [vmem:[#allocation7] sm:$0xff]
        %v976 = vld [vmem:[#allocation7 + $0x8] sm:$0xff]
        %v977 = vld [vmem:[#allocation7 + $0x10] sm:$0xff]
        %v978 = vld [vmem:[#allocation7 + $0x18] sm:$0xff]
        %v979 = vld [vmem:[#allocation7 + $0x20] sm:$0xff]
        %v980 = vld [vmem:[#allocation7 + $0x28] sm:$0xff]
        %v981 = vld [vmem:[#allocation7 + $0x30] sm:$0xff]
        %v982 = vld [vmem:[#allocation7 + $0x38] sm:$0xff]
        %v983 = vld [vmem:[#allocation7 + $0x40] sm:$0xff]
        %v984 = vld [vmem:[#allocation7 + $0x48] sm:$0xff]
        %v985 = vld [vmem:[#allocation7 + $0x50] sm:$0xff]
        %v986 = vld [vmem:[#allocation7 + $0x58] sm:$0xff]
        %v987 = vld [vmem:[#allocation7 + $0x60] sm:$0xff]
        %v988 = vld [vmem:[#allocation7 + $0x68] sm:$0xff]
        %v989 = vld [vmem:[#allocation7 + $0x70] sm:$0xff]
        %v990 = vld [vmem:[#allocation7 + $0x78] sm:$0xff]
        %v991 = vld [vmem:[%s4] sm:$0x3]
        %v993 = vlaneseq
        %v994 = vshrl.u32 %v993, 7
        %v995 = vsub.s32 0, %v994
        %v996 = vrot.slane %v991, %v995
        %v997 = vlaneseq
        %v998 = vshrl.u32 %v997, 7
        %v999 = vsub.s32 1, %v998
        %v1000 = vrot.slane %v991, %v999
        %v1019 = vunpack.c.l.b16 %v975
        %v1020 = vunpack.c.h.b16 %v975
        %v1021 = vunpack.c.l.b16 %v976
        %v1022 = vunpack.c.h.b16 %v976
        %v1023 = vunpack.c.l.b16 %v977
        %v1024 = vunpack.c.h.b16 %v977
        %v1025 = vunpack.c.l.b16 %v978
        %v1026 = vunpack.c.h.b16 %v978
        %v1027 = vunpack.c.l.b16 %v979
        %v1028 = vunpack.c.h.b16 %v979
        %v1029 = vunpack.c.l.b16 %v980
        %v1030 = vunpack.c.h.b16 %v980
        %v1031 = vunpack.c.l.b16 %v981
        %v1032 = vunpack.c.h.b16 %v981
        %v1033 = vunpack.c.l.b16 %v982
        %v1034 = vunpack.c.h.b16 %v982
        %v1035 = vunpack.c.l.b16 %v983
        %v1036 = vunpack.c.h.b16 %v983
        %v1037 = vunpack.c.l.b16 %v984
        %v1038 = vunpack.c.h.b16 %v984
        %v1039 = vunpack.c.l.b16 %v985
        %v1040 = vunpack.c.h.b16 %v985
        %v1041 = vunpack.c.l.b16 %v986
        %v1042 = vunpack.c.h.b16 %v986
        %v1043 = vunpack.c.l.b16 %v987
        %v1044 = vunpack.c.h.b16 %v987
        %v1045 = vunpack.c.l.b16 %v988
        %v1046 = vunpack.c.h.b16 %v988
        %v1047 = vunpack.c.l.b16 %v989
        %v1048 = vunpack.c.h.b16 %v989
        %v1049 = vunpack.c.l.b16 %v990
        %v1050 = vunpack.c.h.b16 %v990
        %v1051 = vpack.c.b16 %v1021, %v1019
        %v1052 = vpack.c.b16 %v1022, %v1020
        %v1053 = vpack.c.b16 %v1025, %v1023
        %v1054 = vpack.c.b16 %v1026, %v1024
        %v1055 = vpack.c.b16 %v1029, %v1027
        %v1056 = vpack.c.b16 %v1030, %v1028
        %v1057 = vpack.c.b16 %v1033, %v1031
        %v1058 = vpack.c.b16 %v1034, %v1032
        %v1059 = vpack.c.b16 %v1037, %v1035
        %v1060 = vpack.c.b16 %v1038, %v1036
        %v1061 = vpack.c.b16 %v1041, %v1039
        %v1062 = vpack.c.b16 %v1042, %v1040
        %v1063 = vpack.c.b16 %v1045, %v1043
        %v1064 = vpack.c.b16 %v1046, %v1044
        %v1065 = vpack.c.b16 %v1049, %v1047
        %v1066 = vpack.c.b16 %v1050, %v1048
        %1083 = vmatprep.subr.bf16.mxu0 %v1052
        %1084 = vmatpush1.bf16.msra.mxu0 %v1051
        %1085 = vmatprep.subr.bf16.mxu0 %v1054
        %1086 = vmatpush1.bf16.msra.mxu0 %v1053
        %1087 = vmatprep.subr.bf16.mxu0 %v1056
        %1088 = vmatpush1.bf16.msra.mxu0 %v1055
        %1089 = vmatprep.subr.bf16.mxu0 %v1058
        %1090 = vmatpush1.bf16.msra.mxu0 %v1057
        %1091 = vmatprep.subr.bf16.mxu0 %v1060
        %1092 = vmatpush1.bf16.msra.mxu0 %v1059
        %1093 = vmatprep.subr.bf16.mxu0 %v1062
        %1094 = vmatpush1.bf16.msra.mxu0 %v1061
        %1095 = vmatprep.subr.bf16.mxu0 %v1064
        %1096 = vmatpush1.bf16.msra.mxu0 %v1063
        %1097 = vmatprep.subr.bf16.mxu0 %v1066
        %1098 = vmatpush1.bf16.msra.mxu0 %v1065
        %1099 = vmatprep.subr.bf16.mxu0 0
        %1100 = vmatpush1.bf16.msra.mxu0 0
        %1101 = vmatprep.subr.bf16.mxu0 0
        %1102 = vmatpush1.bf16.msra.mxu0 0
        %1103 = vmatprep.subr.bf16.mxu0 0
        %1104 = vmatpush1.bf16.msra.mxu0 0
        %1105 = vmatprep.subr.bf16.mxu0 0
        %1106 = vmatpush1.bf16.msra.mxu0 0
        %1107 = vmatprep.subr.bf16.mxu0 0
        %1108 = vmatpush1.bf16.msra.mxu0 0
        %1109 = vmatprep.subr.bf16.mxu0 0
        %1110 = vmatpush1.bf16.msra.mxu0 0
        %1111 = vmatprep.subr.bf16.mxu0 0
        %1112 = vmatpush1.bf16.msra.mxu0 0
        %1113 = vmatprep.subr.bf16.mxu0 0
        %1114 = vmatpush1.bf16.msra.mxu0 0
        %1115 = vmatprep.mubr.bf16.mxu0 0
        %1116 = vmatmul.mubr.bf16.gmra.mrb[0].mxu0 %v974
        %v1117 = vpop.f32.mrb[0].mxu0
        %v1118 = vadd.f32 %v996, %v1117
        %v1119 = vpop.f32.mrb[0].mxu0
        %v1120 = vadd.f32 %v1000, %v1119
        %v1121 = vpop.f32.mrb[0].mxu0
        %v1122 = vpop.f32.mrb[0].mxu0
        %1123 = vdwg.mxu0
        %v1124 = vtanh.pop %v1118
        %v1125 = vsub.f32 %v587, %v1120
        %v1126 = vsub.f32 0.0, %v1124
        %v1127 = vmul.f32 %v1126, 1.442695
        %v1128 = vpow.pop %v1127
        %v1129 = vmul.f32 %v1125, %v1128
        %v1130 = vld [vmem:[#allocation8] sm:$0xff]
        %v1131 = vld [vmem:[#allocation8 + $0x8] sm:$0xff]
        %v1132 = vld [vmem:[#allocation8 + $0x10] sm:$0xff]
        %v1133 = vld [vmem:[#allocation8 + $0x18] sm:$0xff]
        %v1134 = vld [vmem:[#allocation8 + $0x20] sm:$0xff]
        %v1135 = vld [vmem:[#allocation8 + $0x28] sm:$0xff]
        %v1136 = vld [vmem:[#allocation8 + $0x30] sm:$0xff]
        %v1137 = vld [vmem:[#allocation8 + $0x38] sm:$0xff]
        %v1138 = vld [vmem:[#allocation8 + $0x40] sm:$0xff]
        %v1139 = vld [vmem:[#allocation8 + $0x48] sm:$0xff]
        %v1140 = vld [vmem:[#allocation8 + $0x50] sm:$0xff]
        %v1141 = vld [vmem:[#allocation8 + $0x58] sm:$0xff]
        %v1142 = vld [vmem:[#allocation8 + $0x60] sm:$0xff]
        %v1143 = vld [vmem:[#allocation8 + $0x68] sm:$0xff]
        %v1144 = vld [vmem:[#allocation8 + $0x70] sm:$0xff]
        %v1145 = vld [vmem:[#allocation8 + $0x78] sm:$0xff]
        %v1146 = vpack.c.bf16 %v1129, %v1129
        %v1147 = vld [vmem:[#allocation8 + $0x80] sm:$0xff]
        %v1148 = vld [vmem:[#allocation8 + $0x88] sm:$0xff]
        %v1149 = vld [vmem:[#allocation8 + $0x90] sm:$0xff]
        %v1150 = vld [vmem:[#allocation8 + $0x98] sm:$0xff]
        %v1151 = vld [vmem:[#allocation8 + $0xa0] sm:$0xff]
        %v1152 = vld [vmem:[#allocation8 + $0xa8] sm:$0xff]
        %v1153 = vld [vmem:[#allocation8 + $0xb0] sm:$0xff]
        %v1154 = vld [vmem:[#allocation8 + $0xb8] sm:$0xff]
        %v1155 = vld [vmem:[#allocation8 + $0xc0] sm:$0xff]
        %v1156 = vld [vmem:[#allocation8 + $0xc8] sm:$0xff]
        %v1157 = vld [vmem:[#allocation8 + $0xd0] sm:$0xff]
        %v1158 = vld [vmem:[#allocation8 + $0xd8] sm:$0xff]
        %v1159 = vld [vmem:[#allocation8 + $0xe0] sm:$0xff]
        %v1160 = vld [vmem:[#allocation8 + $0xe8] sm:$0xff]
        %v1161 = vld [vmem:[#allocation8 + $0xf0] sm:$0xff]
        %v1162 = vld [vmem:[#allocation8 + $0xf8] sm:$0xff]
        %v1179 = vunpack.c.l.b16 %v1147
        %v1180 = vunpack.c.h.b16 %v1147
        %v1181 = vunpack.c.l.b16 %v1148
        %v1182 = vunpack.c.h.b16 %v1148
        %v1183 = vunpack.c.l.b16 %v1149
        %v1184 = vunpack.c.h.b16 %v1149
        %v1185 = vunpack.c.l.b16 %v1150
        %v1186 = vunpack.c.h.b16 %v1150
        %v1187 = vunpack.c.l.b16 %v1151
        %v1188 = vunpack.c.h.b16 %v1151
        %v1189 = vunpack.c.l.b16 %v1152
        %v1190 = vunpack.c.h.b16 %v1152
        %v1191 = vunpack.c.l.b16 %v1153
        %v1192 = vunpack.c.h.b16 %v1153
        %v1193 = vunpack.c.l.b16 %v1154
        %v1194 = vunpack.c.h.b16 %v1154
        %v1195 = vunpack.c.l.b16 %v1155
        %v1196 = vunpack.c.h.b16 %v1155
        %v1197 = vunpack.c.l.b16 %v1156
        %v1198 = vunpack.c.h.b16 %v1156
        %v1199 = vunpack.c.l.b16 %v1157
        %v1200 = vunpack.c.h.b16 %v1157
        %v1201 = vunpack.c.l.b16 %v1158
        %v1202 = vunpack.c.h.b16 %v1158
        %v1203 = vunpack.c.l.b16 %v1159
        %v1204 = vunpack.c.h.b16 %v1159
        %v1205 = vunpack.c.l.b16 %v1160
        %v1206 = vunpack.c.h.b16 %v1160
        %v1207 = vunpack.c.l.b16 %v1161
        %v1208 = vunpack.c.h.b16 %v1161
        %v1209 = vunpack.c.l.b16 %v1162
        %v1210 = vunpack.c.h.b16 %v1162
        %v1211 = vpack.c.b16 %v1181, %v1179
        %v1212 = vpack.c.b16 %v1182, %v1180
        %v1213 = vpack.c.b16 %v1185, %v1183
        %v1214 = vpack.c.b16 %v1186, %v1184
        %v1215 = vpack.c.b16 %v1189, %v1187
        %v1216 = vpack.c.b16 %v1190, %v1188
        %v1217 = vpack.c.b16 %v1193, %v1191
        %v1218 = vpack.c.b16 %v1194, %v1192
        %v1219 = vpack.c.b16 %v1197, %v1195
        %v1220 = vpack.c.b16 %v1198, %v1196
        %v1221 = vpack.c.b16 %v1201, %v1199
        %v1222 = vpack.c.b16 %v1202, %v1200
        %v1223 = vpack.c.b16 %v1205, %v1203
        %v1224 = vpack.c.b16 %v1206, %v1204
        %v1225 = vpack.c.b16 %v1209, %v1207
        %v1226 = vpack.c.b16 %v1210, %v1208
        %1243 = vmatprep.subr.bf16.mxu0 %v1212
        %1244 = vmatpush1.bf16.msra.mxu0 %v1211
        %1245 = vmatprep.subr.bf16.mxu0 %v1214
        %1246 = vmatpush1.bf16.msra.mxu0 %v1213
        %1247 = vmatprep.subr.bf16.mxu0 %v1216
        %1248 = vmatpush1.bf16.msra.mxu0 %v1215
        %1249 = vmatprep.subr.bf16.mxu0 %v1218
        %1250 = vmatpush1.bf16.msra.mxu0 %v1217
        %1251 = vmatprep.subr.bf16.mxu0 %v1220
        %1252 = vmatpush1.bf16.msra.mxu0 %v1219
        %1253 = vmatprep.subr.bf16.mxu0 %v1222
        %1254 = vmatpush1.bf16.msra.mxu0 %v1221
        %1255 = vmatprep.subr.bf16.mxu0 %v1224
        %1256 = vmatpush1.bf16.msra.mxu0 %v1223
        %1257 = vmatprep.subr.bf16.mxu0 %v1226
        %1258 = vmatpush1.bf16.msra.mxu0 %v1225
        %1259 = vmatprep.subr.bf16.mxu0 0
        %1260 = vmatpush1.bf16.msra.mxu0 0
        %1261 = vmatprep.subr.bf16.mxu0 0
        %1262 = vmatpush1.bf16.msra.mxu0 0
        %1263 = vmatprep.subr.bf16.mxu0 0
        %1264 = vmatpush1.bf16.msra.mxu0 0
        %1265 = vmatprep.subr.bf16.mxu0 0
        %1266 = vmatpush1.bf16.msra.mxu0 0
        %1267 = vmatprep.subr.bf16.mxu0 0
        %1268 = vmatpush1.bf16.msra.mxu0 0
        %1269 = vmatprep.subr.bf16.mxu0 0
        %1270 = vmatpush1.bf16.msra.mxu0 0
        %1271 = vmatprep.subr.bf16.mxu0 0
        %1272 = vmatpush1.bf16.msra.mxu0 0
        %1273 = vmatprep.subr.bf16.mxu0 0
        %1274 = vmatpush1.bf16.msra.mxu0 0
        %1275 = vmatprep.mubr.bf16.mxu0 0
        %1276 = vmatmul.mubr.bf16.gmra.mrb[0].mxu0 %v1146
        %v1277 = vpop.f32.mrb[0].mxu0
        %v1278 = vadd.f32 0.0, %v1277
        %v1279 = vpop.f32.mrb[0].mxu0
        %v1280 = vadd.f32 0.0, %v1279
        %v1281 = vpop.f32.mrb[0].mxu0
        %v1282 = vpop.f32.mrb[0].mxu0
        %1283 = vdwg.mxu0
        %v1300 = vunpack.c.l.b16 %v1130
        %v1301 = vunpack.c.h.b16 %v1130
        %v1302 = vunpack.c.l.b16 %v1131
        %v1303 = vunpack.c.h.b16 %v1131
        %v1304 = vunpack.c.l.b16 %v1132
        %v1305 = vunpack.c.h.b16 %v1132
        %v1306 = vunpack.c.l.b16 %v1133
        %v1307 = vunpack.c.h.b16 %v1133
        %v1308 = vunpack.c.l.b16 %v1134
        %v1309 = vunpack.c.h.b16 %v1134
        %v1310 = vunpack.c.l.b16 %v1135
        %v1311 = vunpack.c.h.b16 %v1135
        %v1312 = vunpack.c.l.b16 %v1136
        %v1313 = vunpack.c.h.b16 %v1136
        %v1314 = vunpack.c.l.b16 %v1137
        %v1315 = vunpack.c.h.b16 %v1137
        %v1316 = vunpack.c.l.b16 %v1138
        %v1317 = vunpack.c.h.b16 %v1138
        %v1318 = vunpack.c.l.b16 %v1139
        %v1319 = vunpack.c.h.b16 %v1139
        %v1320 = vunpack.c.l.b16 %v1140
        %v1321 = vunpack.c.h.b16 %v1140
        %v1322 = vunpack.c.l.b16 %v1141
        %v1323 = vunpack.c.h.b16 %v1141
        %v1324 = vunpack.c.l.b16 %v1142
        %v1325 = vunpack.c.h.b16 %v1142
        %v1326 = vunpack.c.l.b16 %v1143
        %v1327 = vunpack.c.h.b16 %v1143
        %v1328 = vunpack.c.l.b16 %v1144
        %v1329 = vunpack.c.h.b16 %v1144
        %v1330 = vunpack.c.l.b16 %v1145
        %v1331 = vunpack.c.h.b16 %v1145
        %v1332 = vpack.c.b16 %v1302, %v1300
        %v1333 = vpack.c.b16 %v1303, %v1301
        %v1334 = vpack.c.b16 %v1306, %v1304
        %v1335 = vpack.c.b16 %v1307, %v1305
        %v1336 = vpack.c.b16 %v1310, %v1308
        %v1337 = vpack.c.b16 %v1311, %v1309
        %v1338 = vpack.c.b16 %v1314, %v1312
        %v1339 = vpack.c.b16 %v1315, %v1313
        %v1340 = vpack.c.b16 %v1318, %v1316
        %v1341 = vpack.c.b16 %v1319, %v1317
        %v1342 = vpack.c.b16 %v1322, %v1320
        %v1343 = vpack.c.b16 %v1323, %v1321
        %v1344 = vpack.c.b16 %v1326, %v1324
        %v1345 = vpack.c.b16 %v1327, %v1325
        %v1346 = vpack.c.b16 %v1330, %v1328
        %v1347 = vpack.c.b16 %v1331, %v1329
        %1364 = vmatprep.subr.bf16.mxu0 %v1333
        %1365 = vmatpush1.bf16.msra.mxu0 %v1332
        %1366 = vmatprep.subr.bf16.mxu0 %v1335
        %1367 = vmatpush1.bf16.msra.mxu0 %v1334
        %1368 = vmatprep.subr.bf16.mxu0 %v1337
        %1369 = vmatpush1.bf16.msra.mxu0 %v1336
        %1370 = vmatprep.subr.bf16.mxu0 %v1339
        %1371 = vmatpush1.bf16.msra.mxu0 %v1338
        %1372 = vmatprep.subr.bf16.mxu0 %v1341
        %1373 = vmatpush1.bf16.msra.mxu0 %v1340
        %1374 = vmatprep.subr.bf16.mxu0 %v1343
        %1375 = vmatpush1.bf16.msra.mxu0 %v1342
        %1376 = vmatprep.subr.bf16.mxu0 %v1345
        %1377 = vmatpush1.bf16.msra.mxu0 %v1344
        %1378 = vmatprep.subr.bf16.mxu0 %v1347
        %1379 = vmatpush1.bf16.msra.mxu0 %v1346
        %1380 = vmatprep.subr.bf16.mxu0 0
        %1381 = vmatpush1.bf16.msra.mxu0 0
        %1382 = vmatprep.subr.bf16.mxu0 0
        %1383 = vmatpush1.bf16.msra.mxu0 0
        %1384 = vmatprep.subr.bf16.mxu0 0
        %1385 = vmatpush1.bf16.msra.mxu0 0
        %1386 = vmatprep.subr.bf16.mxu0 0
        %1387 = vmatpush1.bf16.msra.mxu0 0
        %1388 = vmatprep.subr.bf16.mxu0 0
        %1389 = vmatpush1.bf16.msra.mxu0 0
        %1390 = vmatprep.subr.bf16.mxu0 0
        %1391 = vmatpush1.bf16.msra.mxu0 0
        %1392 = vmatprep.subr.bf16.mxu0 0
        %1393 = vmatpush1.bf16.msra.mxu0 0
        %1394 = vmatprep.subr.bf16.mxu0 0
        %1395 = vmatpush1.bf16.msra.mxu0 0
        %1396 = vmatprep.mubr.bf16.mxu0 0
        %1397 = vmatmul.mubr.bf16.gmra.mrb[0].mxu0 %v861
        %v1398 = vpop.f32.mrb[0].mxu0
        %v1399 = vadd.f32 %v1278, %v1398
        %v1400 = vpop.f32.mrb[0].mxu0
        %v1401 = vadd.f32 %v1280, %v1400
        %v1402 = vpop.f32.mrb[0].mxu0
        %v1403 = vpop.f32.mrb[0].mxu0
        %1404 = vdwg.mxu0
        %1405 = vst [vmem:[%s311] sm:$0xff] %v1399
        %1406 = vst [vmem:[%s311 + $0x8] sm:$0xff] %v1401
        %s1407 = sand.u32 %s164, 1
        %s1408 = scalar_lea.sflag [#allocation4], %s1407
        %s1409 = sand.u32 %s164, 1
        %s1410 = smul.addr %s1409, 16
        %s1411 = scalar_lea.vmem [#allocation10], %s1410
        // Predicated region
        $region61: #{tpu_custom_call.1} parent=43 // pred_check
          %p1412 = pneg %p174
        $region62: #{tpu_custom_call.1} parent=43 // pred_check_branch
          %1414 = sbr.rel (%p1412) target = $region64
        $region63: #{tpu_custom_call.1} parent=43 // pred_region
          %s1416 = ssub.s32 256, 256
          %1417 = vsyncadd %s1408, %s1416
          %s1418 = smul.addr %s25, 2
          %s1419 = smul.addr %s1418, 128
          %s1420 = scalar_lea.hbm %s6, %s1419
          %s1422 = sshll.u32 %s1411, 4
          %s1423 = int_to_ptr.vmem [resolvable:$true] %s1422
          %1425 = dma.vmem_to_hbm [thread:$0]  %s1423, 256, %s1420, %s1408
        $region64: #{tpu_custom_call.1} parent=43 // pred_fallthru
          _
      $region44: #{tpu_custom_call.1} parent=5 // pred_fallthru
        _
      %p1426 = scmp.le.s32.totalorder 2, %s20
      // Predicated region
      $region65: #{tpu_custom_call.1} parent=5 // pred_check
        %p1427 = pneg %p1426
      $region66: #{tpu_custom_call.1} parent=5 // pred_check_branch
        %1429 = sbr.rel (%p1427) target = $region68
      $region67: #{tpu_custom_call.1} parent=5 // pred_region
        %s1430 = ssub.s32 %s20, 2
        // Predicated region
        $region69: #{tpu_custom_call.1} parent=67 // pred_check
          %p1431 = pneg %p180
        $region70: #{tpu_custom_call.1} parent=67 // pred_check_branch
          %1433 = sbr.rel (%p1431) target = $region72
        $region71: #{tpu_custom_call.1} parent=67 // pred_region
          %s1434 = sand.u32 %s165, 1
          %s1435 = scalar_lea.sflag [#allocation4], %s1434
          %s1436 = sand.u32 %s165, 1
          %s1437 = smul.addr %s1436, 16
          %s1438 = scalar_lea.vmem [#allocation10], %s1437
          %1439 = dma.done %s1435, 256
        $region72: #{tpu_custom_call.1} parent=67 // pred_fallthru
          _
      $region68: #{tpu_custom_call.1} parent=5 // pred_fallthru
        _
    $region6: #{tpu_custom_call.1} parent=1 // loop_footer
      %s24 = sadd.s32 1, %s20
    $region7: #{tpu_custom_call.1} parent=1 // loop_footer_branch
      %19 = sbr.rel target = $region3
    $region8: #{tpu_custom_call.1} parent=1 // loop_exit
      _
    %1440 = vsyncpa [#allocation3], 1
    %s1441 = scalar_lea.sflag [#allocation3], 1
    %1442 = vsyncpa %s1441, 1
    %1443 = vsyncpa [#allocation6], 1
    %1444 = vsyncpa [#allocation9], 1
    %1445 = vsyncpa [#allocation4], 1
    %s1446 = scalar_lea.sflag [#allocation4], 1
    %1447 = vsyncpa %s1446, 1

</llo_original>
